<compile_context>
chip_gen: v6e
topology: v6e:2x2x1
jax: 0.10.0
libtpu: 0.0.40
codegen_flags: <defaults>
</compile_context>

<pallas_src>
import jax
import jax.numpy as jnp
from jax.experimental import pallas as pl
from jax.experimental.pallas import tpu as pltpu


def _make_fused_kernel(H, W, Cin, F, Cout, B):
    """Builds the fused 3-layer conv kernel processing B images per grid step."""
    HW = H * W
    taps = [(ky, kx) for ky in range(3) for kx in range(3)]  # tap = ky*3 + kx

    def kernel(x_ref, m_ref, w1_ref, b1_ref, w2_ref, b2_ref, w3_ref, b3_ref,
               o_ref):
        masks = m_ref[...]            # (9, HW): 1.0 where tap t is in-bounds
        w1 = w1_ref[...]              # (F, 9*Cin)  tap-major, in-channel-minor
        b1 = b1_ref[...]              # (F, 1)
        w2 = w2_ref[...]              # (F, 9*F)
        b2 = b2_ref[...]              # (F, 1)
        w3 = w3_ref[...]              # (F, 9) if Cout==1 else (Cout, 9*F)
        b3 = b3_ref[...]              # (Cout, 1)

        def taps_of(a):
            # a: (C, HW) f32.  Returns the 9 shifted, zero-padded taps, all
            # computed in-register: lane roll on the XLU + VPU mask multiply.
            outs = []
            for t, (ky, kx) in enumerate(taps):
                if ky == 1 and kx == 1:
                    outs.append(a)               # centre tap: no shift, no mask
                    continue
                s = (ky - 1) * W + (kx - 1)      # tap reads source pixel p + s
                shifted = pltpu.roll(a, shift=(-s) % HW, axis=1)
                outs.append(shifted * masks[t:t + 1, :])
            return outs

        for b in range(B):            # unrolled: B images per grid step
            x0 = x_ref[b].astype(jnp.float32)                  # (Cin, HW)

            # ----- layer 1: Cin -> F -------------------------------------
            h = b1
            for t, patch in enumerate(taps_of(x0)):
                if Cin == 1:
                    # VPU broadcast-FMA: (F,1) * (1,HW) -> (F,HW)
                    h = h + w1[:, t:t + 1] * patch
                else:
                    h = h + jnp.dot(w1[:, t * Cin:(t + 1) * Cin], patch,
                                    preferred_element_type=jnp.float32)

            # ----- layer 2: F -> F, direct 9-tap MXU accumulation --------
            h2 = b2
            for t, patch in enumerate(taps_of(h)):
                h2 = h2 + jnp.dot(w2[:, t * F:(t + 1) * F], patch,
                                  preferred_element_type=jnp.float32)

            # ----- layer 3: F -> Cout ------------------------------------
            if Cout == 1:
                # VPU: 9 broadcast-FMAs over the F sublanes, then one
                # cross-sublane reduce on the XLU (avoids a 1-row MXU matmul).
                acc = jnp.zeros((F, HW), jnp.float32)
                for t, patch in enumerate(taps_of(h2)):
                    acc = acc + w3[:, t:t + 1] * patch          # (F,1)*(F,HW)
                y = jnp.sum(acc, axis=0, keepdims=True) + b3    # (1, HW)
            else:
                y = b3
                for t, patch in enumerate(taps_of(h2)):
                    y = y + jnp.dot(w3[:, t * F:(t + 1) * F], patch,
                                    preferred_element_type=jnp.float32)

            o_ref[b] = jax.nn.sigmoid(4.0 * y).astype(o_ref.dtype)

    return kernel


@jax.jit
def weight_map_ft_forward(x_nchw, params):
    """Forward pass of WeightMapFT. Input/output NCHW like the PyTorch module."""
    (w1, b1), (w2, b2), (w3, b3) = params
    N, Cin, H, W = x_nchw.shape
    F = w1.shape[0]
    Cout = w3.shape[0]
    HW = H * W
    # The in-register roll path assumes a lane-aligned flattened spatial axis.
    assert HW % 128 == 0, "H*W must be a multiple of 128 (see TODO for tiling)"

    # Batch B images per grid step (amortize per-step overhead, bigger DMAs),
    # but keep at least two grid steps so both v7x TensorCores get work.
    B = max(1, min(8, -(-N // 2)))
    Npad = -(-N // B) * B

    # NCHW -> (N, C, H*W): pure metadata reshape, spatial axis becomes lanes.
    x_flat = x_nchw.reshape(N, Cin, HW)
    if Npad != N:
        x_flat = jnp.pad(x_flat, ((0, Npad - N), (0, 0), (0, 0)))

    def to_mat(w):  # torch OIHW -> (O, 9*I), tap-major / in-channel-minor
        O, I = w.shape[0], w.shape[1]
        return jnp.transpose(w, (0, 2, 3, 1)).reshape(O, 9 * I)

    w1m, w2m = to_mat(w1), to_mat(w2)
    if Cout == 1:
        w3m = w3.reshape(F, 9)       # [c, tap] layout for the VPU path
    else:
        w3m = to_mat(w3)             # (Cout, 9*F) for the MXU path
    b1c, b2c, b3c = b1.reshape(F, 1), b2.reshape(F, 1), b3.reshape(Cout, 1)

    # Combined per-tap validity masks (dx AND dy) for SAME zero padding.
    ys = jnp.arange(HW, dtype=jnp.int32) // W
    xs = jnp.arange(HW, dtype=jnp.int32) % W
    mask_rows = []
    for ky in range(3):
        for kx in range(3):
            dy, dx = ky - 1, kx - 1
            vy = jnp.logical_and(ys + dy >= 0, ys + dy <= H - 1)
            vx = jnp.logical_and(xs + dx >= 0, xs + dx <= W - 1)
            mask_rows.append(jnp.logical_and(vy, vx).astype(jnp.float32))
    tap_masks = jnp.stack(mask_rows, axis=0)                    # (9, HW)

    kernel = _make_fused_kernel(H, W, Cin, F, Cout, B)

    # Cost hint for XLA scheduling around the fused custom call.
    weight_bytes = 4 * (w1m.size + w2m.size + w3m.size + b1c.size + b2c.size
                        + b3c.size + tap_masks.size)
    cost = pl.CostEstimate(
        flops=2 * N * HW * 9 * (Cin * F + F * F + F * Cout),
        transcendentals=N * HW * Cout,
        bytes_accessed=4 * Npad * HW * (Cin + Cout) + weight_bytes)

    # Explicit scoped-VMEM budget: actual working set plus headroom, clamped to
    # a value that is safe on every generation (v7x physical VMEM is 64 MiB).
    vmem_need = (2 * (weight_bytes + 4 * B * HW * (Cin + Cout))   # dbl-buffered IO
                 + 4 * B * HW * (Cin + 4 * F + Cout))             # live activations
    vmem_limit = int(min(32 * 2 ** 20, max(16 * 2 ** 20, 2 * vmem_need)))

    out_flat = pl.pallas_call(
        kernel,
        out_shape=jax.ShapeDtypeStruct((Npad, Cout, HW), x_nchw.dtype),
        grid=(Npad // B,),
        in_specs=[
            pl.BlockSpec((B, Cin, HW), lambda n: (n, 0, 0)),      # x
            pl.BlockSpec((9, HW), lambda n: (0, 0)),              # tap masks
            pl.BlockSpec((F, 9 * Cin), lambda n: (0, 0)),         # w1
            pl.BlockSpec((F, 1), lambda n: (0, 0)),               # b1
            pl.BlockSpec((F, 9 * F), lambda n: (0, 0)),           # w2
            pl.BlockSpec((F, 1), lambda n: (0, 0)),               # b2
            pl.BlockSpec(w3m.shape, lambda n: (0, 0)),            # w3
            pl.BlockSpec((Cout, 1), lambda n: (0, 0)),            # b3
        ],
        out_specs=pl.BlockSpec((B, Cout, HW), lambda n: (n, 0, 0)),
        compiler_params=pltpu.CompilerParams(
            dimension_semantics=("parallel",),
            vmem_limit_bytes=vmem_limit),
        cost_estimate=cost,
    )(x_flat, tap_masks, w1m, b1c, w2m, b2c, w3m, b3c)

    return out_flat[:N].reshape(N, Cout, H, W)


def init_params(key, num_in_ch=1, num_out_ch=1, num_feat=16):
    """Deterministic parameter init (torch.nn.Conv2d shapes: OIHW weights)."""
    ks = jax.random.split(key, 6)

    def conv_init(kw, kb, cin, cout):
        fan_in = cin * 3 * 3
        bound = 1.0 / jnp.sqrt(fan_in)
        w = jax.random.uniform(kw, (cout, cin, 3, 3), jnp.float32, -bound, bound)
        b = jax.random.uniform(kb, (cout,), jnp.float32, -bound, bound)
        return w, b

    w1, b1 = conv_init(ks[0], ks[1], num_in_ch, num_feat)
    w2, b2 = conv_init(ks[2], ks[3], num_feat, num_feat)
    w3, b3 = conv_init(ks[4], ks[5], num_feat, num_out_ch)
    return (w1, b1), (w2, b2), (w3, b3)


def _reference_forward(x_nchw, params):
    """Pure-JAX (XLA conv) reference for correctness checking."""
    (w1, b1), (w2, b2), (w3, b3) = params

    def conv(x, w, b):
        y = jax.lax.conv_general_dilated(
            x, w, window_strides=(1, 1), padding="SAME",
            dimension_numbers=("NCHW", "OIHW", "NCHW"))
        return y + b.reshape(1, -1, 1, 1)

    x = conv(x_nchw, w1, b1)
    x = conv(x, w2, b2)
    x = conv(x, w3, b3)
    return jax.nn.sigmoid(4.0 * x)


if __name__ == "__main__":
    key = jax.random.PRNGKey(0)
    kx, kp = jax.random.split(key)

    N, Cin, H, W = 2, 1, 16, 16
    x = jax.random.normal(kx, (N, Cin, H, W), jnp.float32)
    params = init_params(kp, num_in_ch=1, num_out_ch=1, num_feat=16)

    out = jax.block_until_ready(weight_map_ft_forward(x, params))
    ref = _reference_forward(x, params)

    assert out.shape == (N, 1, H, W), out.shape
    max_err = float(jnp.max(jnp.abs(out - ref)))
    assert max_err < 5e-5, max_err

    print("KERNEL_OK")
</pallas_src>

<mosaic_0001>
module attributes {stable_mosaic.version = 11 : i64} {
  func.func @kernel(%arg0: i32, %arg1: memref<1x1x256xf32, #tpu.memory_space<vmem>>, %arg2: memref<9x256xf32, #tpu.memory_space<vmem>>, %arg3: memref<16x9xf32, #tpu.memory_space<vmem>>, %arg4: memref<16x1xf32, #tpu.memory_space<vmem>>, %arg5: memref<16x144xf32, #tpu.memory_space<vmem>>, %arg6: memref<16x1xf32, #tpu.memory_space<vmem>>, %arg7: memref<16x9xf32, #tpu.memory_space<vmem>>, %arg8: memref<1x1xf32, #tpu.memory_space<vmem>>, %arg9: memref<1x1x256xf32, #tpu.memory_space<vmem>>) attributes {dimension_semantics = [#tpu.dimension_semantics<parallel>], iteration_bounds = array<i64: 2>, scalar_prefetch = 0 : i64, scratch_operands = 0 : i64, tpu.core_type = #tpu.core_type<tc>, window_params = [{transform_indices = @transform_0, window_bounds = array<i64: 1, 1, 256>}, {pipeline_mode = #tpu.pipeline_mode<synchronous>, transform_indices = @transform_1, window_bounds = array<i64: 9, 256>}, {pipeline_mode = #tpu.pipeline_mode<synchronous>, transform_indices = @transform_2, window_bounds = array<i64: 16, 9>}, {pipeline_mode = #tpu.pipeline_mode<synchronous>, transform_indices = @transform_3, window_bounds = array<i64: 16, 1>}, {pipeline_mode = #tpu.pipeline_mode<synchronous>, transform_indices = @transform_4, window_bounds = array<i64: 16, 144>}, {pipeline_mode = #tpu.pipeline_mode<synchronous>, transform_indices = @transform_5, window_bounds = array<i64: 16, 1>}, {pipeline_mode = #tpu.pipeline_mode<synchronous>, transform_indices = @transform_6, window_bounds = array<i64: 16, 9>}, {pipeline_mode = #tpu.pipeline_mode<synchronous>, transform_indices = @transform_7, window_bounds = array<i64: 1, 1>}, {transform_indices = @transform_8, window_bounds = array<i64: 1, 1, 256>}]} {
    %c0 = arith.constant 0 : index
    %c0_0 = arith.constant 0 : index
    %0 = vector.load %arg2[%c0, %c0_0] : memref<9x256xf32, #tpu.memory_space<vmem>>, vector<9x256xf32>
    %c0_1 = arith.constant 0 : index
    %c0_2 = arith.constant 0 : index
    %1 = vector.load %arg3[%c0_1, %c0_2] : memref<16x9xf32, #tpu.memory_space<vmem>>, vector<16x9xf32>
    %c0_3 = arith.constant 0 : index
    %c0_4 = arith.constant 0 : index
    %2 = vector.load %arg4[%c0_3, %c0_4] : memref<16x1xf32, #tpu.memory_space<vmem>>, vector<16x1xf32>
    %c0_5 = arith.constant 0 : index
    %c0_6 = arith.constant 0 : index
    %3 = vector.load %arg5[%c0_5, %c0_6] : memref<16x144xf32, #tpu.memory_space<vmem>>, vector<16x144xf32>
    %c0_7 = arith.constant 0 : index
    %c0_8 = arith.constant 0 : index
    %4 = vector.load %arg6[%c0_7, %c0_8] : memref<16x1xf32, #tpu.memory_space<vmem>>, vector<16x1xf32>
    %c0_9 = arith.constant 0 : index
    %c0_10 = arith.constant 0 : index
    %5 = vector.load %arg7[%c0_9, %c0_10] : memref<16x9xf32, #tpu.memory_space<vmem>>, vector<16x9xf32>
    %c0_11 = arith.constant 0 : index
    %c0_12 = arith.constant 0 : index
    %6 = vector.load %arg8[%c0_11, %c0_12] : memref<1x1xf32, #tpu.memory_space<vmem>>, vector<1x1xf32>
    %c0_13 = arith.constant 0 : index
    %c0_14 = arith.constant 0 : index
    %c0_15 = arith.constant 0 : index
    %7 = vector.load %arg1[%c0_13, %c0_14, %c0_15] : memref<1x1x256xf32, #tpu.memory_space<vmem>>, vector<1x1x256xf32>
    %8 = vector.shape_cast %7 : vector<1x1x256xf32> to vector<1x256xf32>
    %c17_i32 = arith.constant 17 : i32
    %9 = tpu.dynamic_rotate %8 by %c17_i32 dim 1 : vector<1x256xf32>, i32 -> vector<1x256xf32>
    %10 = vector.extract_strided_slice %0 {offsets = [0, 0], sizes = [1, 256], strides = [1, 1]} : vector<9x256xf32> to vector<1x256xf32>
    %11 = arith.mulf %9, %10 : vector<1x256xf32>
    %c16_i32 = arith.constant 16 : i32
    %12 = tpu.dynamic_rotate %8 by %c16_i32 dim 1 : vector<1x256xf32>, i32 -> vector<1x256xf32>
    %13 = vector.extract_strided_slice %0 {offsets = [1, 0], sizes = [1, 256], strides = [1, 1]} : vector<9x256xf32> to vector<1x256xf32>
    %14 = arith.mulf %12, %13 : vector<1x256xf32>
    %c15_i32 = arith.constant 15 : i32
    %15 = tpu.dynamic_rotate %8 by %c15_i32 dim 1 : vector<1x256xf32>, i32 -> vector<1x256xf32>
    %16 = vector.extract_strided_slice %0 {offsets = [2, 0], sizes = [1, 256], strides = [1, 1]} : vector<9x256xf32> to vector<1x256xf32>
    %17 = arith.mulf %15, %16 : vector<1x256xf32>
    %c1_i32 = arith.constant 1 : i32
    %18 = tpu.dynamic_rotate %8 by %c1_i32 dim 1 : vector<1x256xf32>, i32 -> vector<1x256xf32>
    %19 = vector.extract_strided_slice %0 {offsets = [3, 0], sizes = [1, 256], strides = [1, 1]} : vector<9x256xf32> to vector<1x256xf32>
    %20 = arith.mulf %18, %19 : vector<1x256xf32>
    %c255_i32 = arith.constant 255 : i32
    %21 = tpu.dynamic_rotate %8 by %c255_i32 dim 1 : vector<1x256xf32>, i32 -> vector<1x256xf32>
    %22 = vector.extract_strided_slice %0 {offsets = [5, 0], sizes = [1, 256], strides = [1, 1]} : vector<9x256xf32> to vector<1x256xf32>
    %23 = arith.mulf %21, %22 : vector<1x256xf32>
    %c241_i32 = arith.constant 241 : i32
    %24 = tpu.dynamic_rotate %8 by %c241_i32 dim 1 : vector<1x256xf32>, i32 -> vector<1x256xf32>
    %25 = vector.extract_strided_slice %0 {offsets = [6, 0], sizes = [1, 256], strides = [1, 1]} : vector<9x256xf32> to vector<1x256xf32>
    %26 = arith.mulf %24, %25 : vector<1x256xf32>
    %c240_i32 = arith.constant 240 : i32
    %27 = tpu.dynamic_rotate %8 by %c240_i32 dim 1 : vector<1x256xf32>, i32 -> vector<1x256xf32>
    %28 = vector.extract_strided_slice %0 {offsets = [7, 0], sizes = [1, 256], strides = [1, 1]} : vector<9x256xf32> to vector<1x256xf32>
    %29 = arith.mulf %27, %28 : vector<1x256xf32>
    %c239_i32 = arith.constant 239 : i32
    %30 = tpu.dynamic_rotate %8 by %c239_i32 dim 1 : vector<1x256xf32>, i32 -> vector<1x256xf32>
    %31 = vector.extract_strided_slice %0 {offsets = [8, 0], sizes = [1, 256], strides = [1, 1]} : vector<9x256xf32> to vector<1x256xf32>
    %32 = arith.mulf %30, %31 : vector<1x256xf32>
    %33 = vector.extract_strided_slice %1 {offsets = [0, 0], sizes = [16, 1], strides = [1, 1]} : vector<16x9xf32> to vector<16x1xf32>
    %34 = vector.broadcast %33 : vector<16x1xf32> to vector<16x256xf32>
    %35 = vector.broadcast %11 : vector<1x256xf32> to vector<16x256xf32>
    %36 = arith.mulf %34, %35 : vector<16x256xf32>
    %37 = vector.broadcast %2 : vector<16x1xf32> to vector<16x256xf32>
    %38 = arith.addf %37, %36 : vector<16x256xf32>
    %39 = vector.extract_strided_slice %1 {offsets = [0, 1], sizes = [16, 1], strides = [1, 1]} : vector<16x9xf32> to vector<16x1xf32>
    %40 = vector.broadcast %39 : vector<16x1xf32> to vector<16x256xf32>
    %41 = vector.broadcast %14 : vector<1x256xf32> to vector<16x256xf32>
    %42 = arith.mulf %40, %41 : vector<16x256xf32>
    %43 = arith.addf %38, %42 : vector<16x256xf32>
    %44 = vector.extract_strided_slice %1 {offsets = [0, 2], sizes = [16, 1], strides = [1, 1]} : vector<16x9xf32> to vector<16x1xf32>
    %45 = vector.broadcast %44 : vector<16x1xf32> to vector<16x256xf32>
    %46 = vector.broadcast %17 : vector<1x256xf32> to vector<16x256xf32>
    %47 = arith.mulf %45, %46 : vector<16x256xf32>
    %48 = arith.addf %43, %47 : vector<16x256xf32>
    %49 = vector.extract_strided_slice %1 {offsets = [0, 3], sizes = [16, 1], strides = [1, 1]} : vector<16x9xf32> to vector<16x1xf32>
    %50 = vector.broadcast %49 : vector<16x1xf32> to vector<16x256xf32>
    %51 = vector.broadcast %20 : vector<1x256xf32> to vector<16x256xf32>
    %52 = arith.mulf %50, %51 : vector<16x256xf32>
    %53 = arith.addf %48, %52 : vector<16x256xf32>
    %54 = vector.extract_strided_slice %1 {offsets = [0, 4], sizes = [16, 1], strides = [1, 1]} : vector<16x9xf32> to vector<16x1xf32>
    %55 = vector.broadcast %54 : vector<16x1xf32> to vector<16x256xf32>
    %56 = vector.broadcast %8 : vector<1x256xf32> to vector<16x256xf32>
    %57 = arith.mulf %55, %56 : vector<16x256xf32>
    %58 = arith.addf %53, %57 : vector<16x256xf32>
    %59 = vector.extract_strided_slice %1 {offsets = [0, 5], sizes = [16, 1], strides = [1, 1]} : vector<16x9xf32> to vector<16x1xf32>
    %60 = vector.broadcast %59 : vector<16x1xf32> to vector<16x256xf32>
    %61 = vector.broadcast %23 : vector<1x256xf32> to vector<16x256xf32>
    %62 = arith.mulf %60, %61 : vector<16x256xf32>
    %63 = arith.addf %58, %62 : vector<16x256xf32>
    %64 = vector.extract_strided_slice %1 {offsets = [0, 6], sizes = [16, 1], strides = [1, 1]} : vector<16x9xf32> to vector<16x1xf32>
    %65 = vector.broadcast %64 : vector<16x1xf32> to vector<16x256xf32>
    %66 = vector.broadcast %26 : vector<1x256xf32> to vector<16x256xf32>
    %67 = arith.mulf %65, %66 : vector<16x256xf32>
    %68 = arith.addf %63, %67 : vector<16x256xf32>
    %69 = vector.extract_strided_slice %1 {offsets = [0, 7], sizes = [16, 1], strides = [1, 1]} : vector<16x9xf32> to vector<16x1xf32>
    %70 = vector.broadcast %69 : vector<16x1xf32> to vector<16x256xf32>
    %71 = vector.broadcast %29 : vector<1x256xf32> to vector<16x256xf32>
    %72 = arith.mulf %70, %71 : vector<16x256xf32>
    %73 = arith.addf %68, %72 : vector<16x256xf32>
    %74 = vector.extract_strided_slice %1 {offsets = [0, 8], sizes = [16, 1], strides = [1, 1]} : vector<16x9xf32> to vector<16x1xf32>
    %75 = vector.broadcast %74 : vector<16x1xf32> to vector<16x256xf32>
    %76 = vector.broadcast %32 : vector<1x256xf32> to vector<16x256xf32>
    %77 = arith.mulf %75, %76 : vector<16x256xf32>
    %78 = arith.addf %73, %77 : vector<16x256xf32>
    %c17_i32_16 = arith.constant 17 : i32
    %79 = tpu.dynamic_rotate %78 by %c17_i32_16 dim 1 : vector<16x256xf32>, i32 -> vector<16x256xf32>
    %80 = vector.extract_strided_slice %0 {offsets = [0, 0], sizes = [1, 256], strides = [1, 1]} : vector<9x256xf32> to vector<1x256xf32>
    %81 = vector.broadcast %80 : vector<1x256xf32> to vector<16x256xf32>
    %82 = arith.mulf %79, %81 : vector<16x256xf32>
    %c16_i32_17 = arith.constant 16 : i32
    %83 = tpu.dynamic_rotate %78 by %c16_i32_17 dim 1 : vector<16x256xf32>, i32 -> vector<16x256xf32>
    %84 = vector.extract_strided_slice %0 {offsets = [1, 0], sizes = [1, 256], strides = [1, 1]} : vector<9x256xf32> to vector<1x256xf32>
    %85 = vector.broadcast %84 : vector<1x256xf32> to vector<16x256xf32>
    %86 = arith.mulf %83, %85 : vector<16x256xf32>
    %c15_i32_18 = arith.constant 15 : i32
    %87 = tpu.dynamic_rotate %78 by %c15_i32_18 dim 1 : vector<16x256xf32>, i32 -> vector<16x256xf32>
    %88 = vector.extract_strided_slice %0 {offsets = [2, 0], sizes = [1, 256], strides = [1, 1]} : vector<9x256xf32> to vector<1x256xf32>
    %89 = vector.broadcast %88 : vector<1x256xf32> to vector<16x256xf32>
    %90 = arith.mulf %87, %89 : vector<16x256xf32>
    %c1_i32_19 = arith.constant 1 : i32
    %91 = tpu.dynamic_rotate %78 by %c1_i32_19 dim 1 : vector<16x256xf32>, i32 -> vector<16x256xf32>
    %92 = vector.extract_strided_slice %0 {offsets = [3, 0], sizes = [1, 256], strides = [1, 1]} : vector<9x256xf32> to vector<1x256xf32>
    %93 = vector.broadcast %92 : vector<1x256xf32> to vector<16x256xf32>
    %94 = arith.mulf %91, %93 : vector<16x256xf32>
    %c255_i32_20 = arith.constant 255 : i32
    %95 = tpu.dynamic_rotate %78 by %c255_i32_20 dim 1 : vector<16x256xf32>, i32 -> vector<16x256xf32>
    %96 = vector.extract_strided_slice %0 {offsets = [5, 0], sizes = [1, 256], strides = [1, 1]} : vector<9x256xf32> to vector<1x256xf32>
    %97 = vector.broadcast %96 : vector<1x256xf32> to vector<16x256xf32>
    %98 = arith.mulf %95, %97 : vector<16x256xf32>
    %c241_i32_21 = arith.constant 241 : i32
    %99 = tpu.dynamic_rotate %78 by %c241_i32_21 dim 1 : vector<16x256xf32>, i32 -> vector<16x256xf32>
    %100 = vector.extract_strided_slice %0 {offsets = [6, 0], sizes = [1, 256], strides = [1, 1]} : vector<9x256xf32> to vector<1x256xf32>
    %101 = vector.broadcast %100 : vector<1x256xf32> to vector<16x256xf32>
    %102 = arith.mulf %99, %101 : vector<16x256xf32>
    %c240_i32_22 = arith.constant 240 : i32
    %103 = tpu.dynamic_rotate %78 by %c240_i32_22 dim 1 : vector<16x256xf32>, i32 -> vector<16x256xf32>
    %104 = vector.extract_strided_slice %0 {offsets = [7, 0], sizes = [1, 256], strides = [1, 1]} : vector<9x256xf32> to vector<1x256xf32>
    %105 = vector.broadcast %104 : vector<1x256xf32> to vector<16x256xf32>
    %106 = arith.mulf %103, %105 : vector<16x256xf32>
    %c239_i32_23 = arith.constant 239 : i32
    %107 = tpu.dynamic_rotate %78 by %c239_i32_23 dim 1 : vector<16x256xf32>, i32 -> vector<16x256xf32>
    %108 = vector.extract_strided_slice %0 {offsets = [8, 0], sizes = [1, 256], strides = [1, 1]} : vector<9x256xf32> to vector<1x256xf32>
    %109 = vector.broadcast %108 : vector<1x256xf32> to vector<16x256xf32>
    %110 = arith.mulf %107, %109 : vector<16x256xf32>
    %111 = vector.extract_strided_slice %3 {offsets = [0, 0], sizes = [16, 16], strides = [1, 1]} : vector<16x144xf32> to vector<16x16xf32>
    %cst = arith.constant dense<0.000000e+00> : vector<16x256xf32>
    %112 = tpu.matmul %111, %82, %cst {dimension_numbers = #tpu.dot_dimension_numbers<[1], [0], [0], [1], [0, 0, 1, 1], [], []>} : vector<16x16xf32>, vector<16x256xf32>, vector<16x256xf32> -> vector<16x256xf32>
    %113 = vector.broadcast %4 : vector<16x1xf32> to vector<16x256xf32>
    %114 = arith.addf %113, %112 : vector<16x256xf32>
    %115 = vector.extract_strided_slice %3 {offsets = [0, 16], sizes = [16, 16], strides = [1, 1]} : vector<16x144xf32> to vector<16x16xf32>
    %cst_24 = arith.constant dense<0.000000e+00> : vector<16x256xf32>
    %116 = tpu.matmul %115, %86, %cst_24 {dimension_numbers = #tpu.dot_dimension_numbers<[1], [0], [0], [1], [0, 0, 1, 1], [], []>} : vector<16x16xf32>, vector<16x256xf32>, vector<16x256xf32> -> vector<16x256xf32>
    %117 = arith.addf %114, %116 : vector<16x256xf32>
    %118 = vector.extract_strided_slice %3 {offsets = [0, 32], sizes = [16, 16], strides = [1, 1]} : vector<16x144xf32> to vector<16x16xf32>
    %cst_25 = arith.constant dense<0.000000e+00> : vector<16x256xf32>
    %119 = tpu.matmul %118, %90, %cst_25 {dimension_numbers = #tpu.dot_dimension_numbers<[1], [0], [0], [1], [0, 0, 1, 1], [], []>} : vector<16x16xf32>, vector<16x256xf32>, vector<16x256xf32> -> vector<16x256xf32>
    %120 = arith.addf %117, %119 : vector<16x256xf32>
    %121 = vector.extract_strided_slice %3 {offsets = [0, 48], sizes = [16, 16], strides = [1, 1]} : vector<16x144xf32> to vector<16x16xf32>
    %cst_26 = arith.constant dense<0.000000e+00> : vector<16x256xf32>
    %122 = tpu.matmul %121, %94, %cst_26 {dimension_numbers = #tpu.dot_dimension_numbers<[1], [0], [0], [1], [0, 0, 1, 1], [], []>} : vector<16x16xf32>, vector<16x256xf32>, vector<16x256xf32> -> vector<16x256xf32>
    %123 = arith.addf %120, %122 : vector<16x256xf32>
    %124 = vector.extract_strided_slice %3 {offsets = [0, 64], sizes = [16, 16], strides = [1, 1]} : vector<16x144xf32> to vector<16x16xf32>
    %cst_27 = arith.constant dense<0.000000e+00> : vector<16x256xf32>
    %125 = tpu.matmul %124, %78, %cst_27 {dimension_numbers = #tpu.dot_dimension_numbers<[1], [0], [0], [1], [0, 0, 1, 1], [], []>} : vector<16x16xf32>, vector<16x256xf32>, vector<16x256xf32> -> vector<16x256xf32>
    %126 = arith.addf %123, %125 : vector<16x256xf32>
    %127 = vector.extract_strided_slice %3 {offsets = [0, 80], sizes = [16, 16], strides = [1, 1]} : vector<16x144xf32> to vector<16x16xf32>
    %cst_28 = arith.constant dense<0.000000e+00> : vector<16x256xf32>
    %128 = tpu.matmul %127, %98, %cst_28 {dimension_numbers = #tpu.dot_dimension_numbers<[1], [0], [0], [1], [0, 0, 1, 1], [], []>} : vector<16x16xf32>, vector<16x256xf32>, vector<16x256xf32> -> vector<16x256xf32>
    %129 = arith.addf %126, %128 : vector<16x256xf32>
    %130 = vector.extract_strided_slice %3 {offsets = [0, 96], sizes = [16, 16], strides = [1, 1]} : vector<16x144xf32> to vector<16x16xf32>
    %cst_29 = arith.constant dense<0.000000e+00> : vector<16x256xf32>
    %131 = tpu.matmul %130, %102, %cst_29 {dimension_numbers = #tpu.dot_dimension_numbers<[1], [0], [0], [1], [0, 0, 1, 1], [], []>} : vector<16x16xf32>, vector<16x256xf32>, vector<16x256xf32> -> vector<16x256xf32>
    %132 = arith.addf %129, %131 : vector<16x256xf32>
    %133 = vector.extract_strided_slice %3 {offsets = [0, 112], sizes = [16, 16], strides = [1, 1]} : vector<16x144xf32> to vector<16x16xf32>
    %cst_30 = arith.constant dense<0.000000e+00> : vector<16x256xf32>
    %134 = tpu.matmul %133, %106, %cst_30 {dimension_numbers = #tpu.dot_dimension_numbers<[1], [0], [0], [1], [0, 0, 1, 1], [], []>} : vector<16x16xf32>, vector<16x256xf32>, vector<16x256xf32> -> vector<16x256xf32>
    %135 = arith.addf %132, %134 : vector<16x256xf32>
    %136 = vector.extract_strided_slice %3 {offsets = [0, 128], sizes = [16, 16], strides = [1, 1]} : vector<16x144xf32> to vector<16x16xf32>
    %cst_31 = arith.constant dense<0.000000e+00> : vector<16x256xf32>
    %137 = tpu.matmul %136, %110, %cst_31 {dimension_numbers = #tpu.dot_dimension_numbers<[1], [0], [0], [1], [0, 0, 1, 1], [], []>} : vector<16x16xf32>, vector<16x256xf32>, vector<16x256xf32> -> vector<16x256xf32>
    %138 = arith.addf %135, %137 : vector<16x256xf32>
    %cst_32 = arith.constant 0.000000e+00 : f32
    %139 = vector.broadcast %cst_32 : f32 to vector<16x256xf32>
    %c17_i32_33 = arith.constant 17 : i32
    %140 = tpu.dynamic_rotate %138 by %c17_i32_33 dim 1 : vector<16x256xf32>, i32 -> vector<16x256xf32>
    %141 = vector.extract_strided_slice %0 {offsets = [0, 0], sizes = [1, 256], strides = [1, 1]} : vector<9x256xf32> to vector<1x256xf32>
    %142 = vector.broadcast %141 : vector<1x256xf32> to vector<16x256xf32>
    %143 = arith.mulf %140, %142 : vector<16x256xf32>
    %c16_i32_34 = arith.constant 16 : i32
    %144 = tpu.dynamic_rotate %138 by %c16_i32_34 dim 1 : vector<16x256xf32>, i32 -> vector<16x256xf32>
    %145 = vector.extract_strided_slice %0 {offsets = [1, 0], sizes = [1, 256], strides = [1, 1]} : vector<9x256xf32> to vector<1x256xf32>
    %146 = vector.broadcast %145 : vector<1x256xf32> to vector<16x256xf32>
    %147 = arith.mulf %144, %146 : vector<16x256xf32>
    %c15_i32_35 = arith.constant 15 : i32
    %148 = tpu.dynamic_rotate %138 by %c15_i32_35 dim 1 : vector<16x256xf32>, i32 -> vector<16x256xf32>
    %149 = vector.extract_strided_slice %0 {offsets = [2, 0], sizes = [1, 256], strides = [1, 1]} : vector<9x256xf32> to vector<1x256xf32>
    %150 = vector.broadcast %149 : vector<1x256xf32> to vector<16x256xf32>
    %151 = arith.mulf %148, %150 : vector<16x256xf32>
    %c1_i32_36 = arith.constant 1 : i32
    %152 = tpu.dynamic_rotate %138 by %c1_i32_36 dim 1 : vector<16x256xf32>, i32 -> vector<16x256xf32>
    %153 = vector.extract_strided_slice %0 {offsets = [3, 0], sizes = [1, 256], strides = [1, 1]} : vector<9x256xf32> to vector<1x256xf32>
    %154 = vector.broadcast %153 : vector<1x256xf32> to vector<16x256xf32>
    %155 = arith.mulf %152, %154 : vector<16x256xf32>
    %c255_i32_37 = arith.constant 255 : i32
    %156 = tpu.dynamic_rotate %138 by %c255_i32_37 dim 1 : vector<16x256xf32>, i32 -> vector<16x256xf32>
    %157 = vector.extract_strided_slice %0 {offsets = [5, 0], sizes = [1, 256], strides = [1, 1]} : vector<9x256xf32> to vector<1x256xf32>
    %158 = vector.broadcast %157 : vector<1x256xf32> to vector<16x256xf32>
    %159 = arith.mulf %156, %158 : vector<16x256xf32>
    %c241_i32_38 = arith.constant 241 : i32
    %160 = tpu.dynamic_rotate %138 by %c241_i32_38 dim 1 : vector<16x256xf32>, i32 -> vector<16x256xf32>
    %161 = vector.extract_strided_slice %0 {offsets = [6, 0], sizes = [1, 256], strides = [1, 1]} : vector<9x256xf32> to vector<1x256xf32>
    %162 = vector.broadcast %161 : vector<1x256xf32> to vector<16x256xf32>
    %163 = arith.mulf %160, %162 : vector<16x256xf32>
    %c240_i32_39 = arith.constant 240 : i32
    %164 = tpu.dynamic_rotate %138 by %c240_i32_39 dim 1 : vector<16x256xf32>, i32 -> vector<16x256xf32>
    %165 = vector.extract_strided_slice %0 {offsets = [7, 0], sizes = [1, 256], strides = [1, 1]} : vector<9x256xf32> to vector<1x256xf32>
    %166 = vector.broadcast %165 : vector<1x256xf32> to vector<16x256xf32>
    %167 = arith.mulf %164, %166 : vector<16x256xf32>
    %c239_i32_40 = arith.constant 239 : i32
    %168 = tpu.dynamic_rotate %138 by %c239_i32_40 dim 1 : vector<16x256xf32>, i32 -> vector<16x256xf32>
    %169 = vector.extract_strided_slice %0 {offsets = [8, 0], sizes = [1, 256], strides = [1, 1]} : vector<9x256xf32> to vector<1x256xf32>
    %170 = vector.broadcast %169 : vector<1x256xf32> to vector<16x256xf32>
    %171 = arith.mulf %168, %170 : vector<16x256xf32>
    %172 = vector.extract_strided_slice %5 {offsets = [0, 0], sizes = [16, 1], strides = [1, 1]} : vector<16x9xf32> to vector<16x1xf32>
    %173 = vector.broadcast %172 : vector<16x1xf32> to vector<16x256xf32>
    %174 = arith.mulf %173, %143 : vector<16x256xf32>
    %175 = arith.addf %139, %174 : vector<16x256xf32>
    %176 = vector.extract_strided_slice %5 {offsets = [0, 1], sizes = [16, 1], strides = [1, 1]} : vector<16x9xf32> to vector<16x1xf32>
    %177 = vector.broadcast %176 : vector<16x1xf32> to vector<16x256xf32>
    %178 = arith.mulf %177, %147 : vector<16x256xf32>
    %179 = arith.addf %175, %178 : vector<16x256xf32>
    %180 = vector.extract_strided_slice %5 {offsets = [0, 2], sizes = [16, 1], strides = [1, 1]} : vector<16x9xf32> to vector<16x1xf32>
    %181 = vector.broadcast %180 : vector<16x1xf32> to vector<16x256xf32>
    %182 = arith.mulf %181, %151 : vector<16x256xf32>
    %183 = arith.addf %179, %182 : vector<16x256xf32>
    %184 = vector.extract_strided_slice %5 {offsets = [0, 3], sizes = [16, 1], strides = [1, 1]} : vector<16x9xf32> to vector<16x1xf32>
    %185 = vector.broadcast %184 : vector<16x1xf32> to vector<16x256xf32>
    %186 = arith.mulf %185, %155 : vector<16x256xf32>
    %187 = arith.addf %183, %186 : vector<16x256xf32>
    %188 = vector.extract_strided_slice %5 {offsets = [0, 4], sizes = [16, 1], strides = [1, 1]} : vector<16x9xf32> to vector<16x1xf32>
    %189 = vector.broadcast %188 : vector<16x1xf32> to vector<16x256xf32>
    %190 = arith.mulf %189, %138 : vector<16x256xf32>
    %191 = arith.addf %187, %190 : vector<16x256xf32>
    %192 = vector.extract_strided_slice %5 {offsets = [0, 5], sizes = [16, 1], strides = [1, 1]} : vector<16x9xf32> to vector<16x1xf32>
    %193 = vector.broadcast %192 : vector<16x1xf32> to vector<16x256xf32>
    %194 = arith.mulf %193, %159 : vector<16x256xf32>
    %195 = arith.addf %191, %194 : vector<16x256xf32>
    %196 = vector.extract_strided_slice %5 {offsets = [0, 6], sizes = [16, 1], strides = [1, 1]} : vector<16x9xf32> to vector<16x1xf32>
    %197 = vector.broadcast %196 : vector<16x1xf32> to vector<16x256xf32>
    %198 = arith.mulf %197, %163 : vector<16x256xf32>
    %199 = arith.addf %195, %198 : vector<16x256xf32>
    %200 = vector.extract_strided_slice %5 {offsets = [0, 7], sizes = [16, 1], strides = [1, 1]} : vector<16x9xf32> to vector<16x1xf32>
    %201 = vector.broadcast %200 : vector<16x1xf32> to vector<16x256xf32>
    %202 = arith.mulf %201, %167 : vector<16x256xf32>
    %203 = arith.addf %199, %202 : vector<16x256xf32>
    %204 = vector.extract_strided_slice %5 {offsets = [0, 8], sizes = [16, 1], strides = [1, 1]} : vector<16x9xf32> to vector<16x1xf32>
    %205 = vector.broadcast %204 : vector<16x1xf32> to vector<16x256xf32>
    %206 = arith.mulf %205, %171 : vector<16x256xf32>
    %207 = arith.addf %203, %206 : vector<16x256xf32>
    %cst_41 = arith.constant dense<0.000000e+00> : vector<256xf32>
    %208 = vector.multi_reduction <add>, %207, %cst_41 [0] : vector<16x256xf32> to vector<256xf32>
    %209 = vector.shape_cast %208 : vector<256xf32> to vector<1x256xf32>
    %210 = vector.broadcast %6 : vector<1x1xf32> to vector<1x256xf32>
    %211 = arith.addf %209, %210 : vector<1x256xf32>
    %cst_42 = arith.constant 4.000000e+00 : f32
    %212 = vector.broadcast %cst_42 : f32 to vector<1x256xf32>
    %213 = arith.mulf %212, %211 : vector<1x256xf32>
    %214 = arith.negf %213 : vector<1x256xf32>
    %215 = math.exp %214 : vector<1x256xf32>
    %cst_43 = arith.constant 1.000000e+00 : f32
    %216 = vector.broadcast %cst_43 : f32 to vector<1x256xf32>
    %217 = arith.addf %216, %215 : vector<1x256xf32>
    %218 = arith.divf %216, %217 : vector<1x256xf32>
    %c0_44 = arith.constant 0 : index
    %c0_45 = arith.constant 0 : index
    %c0_46 = arith.constant 0 : index
    %219 = vector.load %arg9[%c0_44, %c0_45, %c0_46] : memref<1x1x256xf32, #tpu.memory_space<vmem>>, vector<1x1x256xf32>
    %220 = vector.shape_cast %219 : vector<1x1x256xf32> to vector<1x256xf32>
    %221 = vector.shape_cast %218 : vector<1x256xf32> to vector<1x1x256xf32>
    tpu.vector_store %arg9[%c0_44, %c0_45, %c0_46], %221 {strides = array<i32>} : memref<1x1x256xf32, #tpu.memory_space<vmem>>, vector<1x1x256xf32>,
    return
  }
  func.func @transform_0(%arg0: i32) -> (i32, i32, i32) {
    %c0_i32 = arith.constant 0 : i32
    %c0_i32_0 = arith.constant 0 : i32
    %c0_i32_1 = arith.constant 0 : i32
    return %arg0, %c0_i32, %c0_i32_0 : i32, i32, i32
  }
  func.func @transform_1(%arg0: i32) -> (i32, i32) {
    %c0_i32 = arith.constant 0 : i32
    %c0_i32_0 = arith.constant 0 : i32
    %c0_i32_1 = arith.constant 0 : i32
    return %c0_i32, %c0_i32_0 : i32, i32
  }
  func.func @transform_2(%arg0: i32) -> (i32, i32) {
    %c0_i32 = arith.constant 0 : i32
    %c0_i32_0 = arith.constant 0 : i32
    %c0_i32_1 = arith.constant 0 : i32
    return %c0_i32, %c0_i32_0 : i32, i32
  }
  func.func @transform_3(%arg0: i32) -> (i32, i32) {
    %c0_i32 = arith.constant 0 : i32
    %c0_i32_0 = arith.constant 0 : i32
    %c0_i32_1 = arith.constant 0 : i32
    return %c0_i32, %c0_i32_0 : i32, i32
  }
  func.func @transform_4(%arg0: i32) -> (i32, i32) {
    %c0_i32 = arith.constant 0 : i32
    %c0_i32_0 = arith.constant 0 : i32
    %c0_i32_1 = arith.constant 0 : i32
    return %c0_i32, %c0_i32_0 : i32, i32
  }
  func.func @transform_5(%arg0: i32) -> (i32, i32) {
    %c0_i32 = arith.constant 0 : i32
    %c0_i32_0 = arith.constant 0 : i32
    %c0_i32_1 = arith.constant 0 : i32
    return %c0_i32, %c0_i32_0 : i32, i32
  }
  func.func @transform_6(%arg0: i32) -> (i32, i32) {
    %c0_i32 = arith.constant 0 : i32
    %c0_i32_0 = arith.constant 0 : i32
    %c0_i32_1 = arith.constant 0 : i32
    return %c0_i32, %c0_i32_0 : i32, i32
  }
  func.func @transform_7(%arg0: i32) -> (i32, i32) {
    %c0_i32 = arith.constant 0 : i32
    %c0_i32_0 = arith.constant 0 : i32
    %c0_i32_1 = arith.constant 0 : i32
    return %c0_i32, %c0_i32_0 : i32, i32
  }
  func.func @transform_8(%arg0: i32) -> (i32, i32, i32) {
    %c0_i32 = arith.constant 0 : i32
    %c0_i32_0 = arith.constant 0 : i32
    %c0_i32_1 = arith.constant 0 : i32
    return %arg0, %c0_i32, %c0_i32_0 : i32, i32, i32
  }
}

</mosaic_0001>

<llo_original>
// kernel: weight_map_ft_forward.1
$region0: #{weight_map_ft_forward.1}
  #allocation0 [shape = 'u32[]', space=smem, size = 0x4, offset = 0x4, fixed_abs, tag = 'smem constant byte address 0x4 - core index']
  #allocation1 [shape = 'u32[144,128]{1,0:T(1,128)}', space=vmem, size = 0x12000, scoped, tag = 'internal scratch']
  #allocation2 [shape = 'f32[1,1]{1,0:T(1,128)S(1)}', space=vmem, size = 0x200, scoped, tag = 'scoped memory for weight_map_ft_forward.1']
  %s0 = inlined_call_operand.vmem [shape: f32[2,1,256], index: 0, kind: input, shape index: {}]
  %s1 = inlined_call_operand.vmem [shape: f32[9,256], index: 1, kind: input, shape index: {}]
  %s2 = inlined_call_operand.vmem [shape: f32[16,9], index: 2, kind: input, shape index: {}]
  %s3 = inlined_call_operand.vmem [shape: f32[16,1], index: 3, kind: input, shape index: {}]
  %s4 = inlined_call_operand.vmem [shape: f32[16,144], index: 4, kind: input, shape index: {}]
  %s5 = inlined_call_operand.vmem [shape: f32[16,1], index: 5, kind: input, shape index: {}]
  %s6 = inlined_call_operand.vmem [shape: f32[16,9], index: 6, kind: input, shape index: {}]
  %s7 = inlined_call_operand.<no memory space> [shape: f32[1,1], index: 7, kind: input, shape index: {}]
  %s8 = inlined_call_operand.vmem [shape: f32[2,1,256], index: 8, kind: output, shape index: {}]
  %s9 = sld [smem:[#allocation0]]
  $region65: #{weight_map_ft_forward.1} parent=0
    _
  %s11 = ssub.s32 1, %s9
  %s12 = scalar_select 0, %s11, %s9
  %v13 = vstv %s7
  %14 = vst [vmem:[#allocation2] sm:$0x1] %v13
  loop: start=0, step=1, limit=4
  $region2: #{weight_map_ft_forward.1} parent=0 // loop_pre_header
    _
  $region3: #{weight_map_ft_forward.1} parent=0 // loop_header
    %s16 = sphi 0, %s20
    %p17 = scmp.ge.s32.totalorder %s16, 4
    %s26 = sphi 0, %s28
    %s29 = sphi 0, %s26
    %s30 = sphi 0, %s29
    %s46 = sphi 0, %s30
    %s50 = sphi 0, %s50
    %s52 = sphi 0, %s50
    %s53 = sphi 0, %s52
    %s67 = sphi 0, %s53
    %s71 = sphi 0, %s71
    %s73 = sphi 0, %s71
    %s74 = sphi 0, %s73
    %s88 = sphi 0, %s74
    %s92 = sphi 0, %s92
    %s94 = sphi 0, %s92
    %s95 = sphi 0, %s94
    %s109 = sphi 0, %s95
    %s113 = sphi 0, %s113
    %s115 = sphi 0, %s113
    %s116 = sphi 0, %s115
    %s130 = sphi 0, %s116
    %s134 = sphi 0, %s134
    %s136 = sphi 0, %s134
    %s137 = sphi 0, %s136
    %s151 = sphi 0, %s137
    %s155 = sphi 0, %s155
    %s157 = sphi 0, %s155
    %s158 = sphi 0, %s157
    %s172 = sphi 0, %s158
    %s176 = sphi 0, %s176
    %s178 = sphi 0, %s176
    %s179 = sphi 0, %s178
    %s193 = sphi 0, %s179
    %s199 = sphi 0, %s201
    %s202 = sphi 0, %s199
    %s203 = sphi 0, %s202
    %s219 = sphi 0, %s203
  $region4: #{weight_map_ft_forward.1} parent=0 // loop_header_branch
    %19 = sbr.rel (%p17) target = $region8
  $region5: #{weight_map_ft_forward.1} parent=0 // loop_body
    %s21 = ssub.s32 %s16, 1
    %s22 = ssub.s32 %s16, 2
    %s23 = sadd.s32 %s16, 1
    %s24 = ssub.s32 %s16, %s23
    %p25 = scmp.eq.s32.totalorder %s24, 0
    %s27 = sadd.s32 %s26, 1
    %s28 = scalar_select %p25, %s26, %s27
    %p31 = pneg %p25
    %p32 = scmp.eq.s32.totalorder %s16, 1
    %p33 = por %p31, %p32
    %p34 = scmp.ne.s32.totalorder %s26, %s29
    %p35 = scmp.eq.s32.totalorder %s16, 0
    %p36 = por %p34, %p35
    %p37 = scmp.ne.s32.totalorder %s26, %s29
    %p38 = scmp.eq.s32.totalorder %s21, 1
    %p39 = por %p37, %p38
    %p40 = scmp.ne.s32.totalorder %s29, %s30
    %p41 = scmp.eq.s32.totalorder %s21, 0
    %p42 = por %p40, %p41
    %p43 = scmp.ne.s32.totalorder %s29, %s30
    %p44 = scmp.eq.s32.totalorder %s22, 1
    %p45 = por %p43, %p44
    %p47 = scmp.ne.s32.totalorder %s30, %s46
    %p48 = scmp.eq.s32.totalorder %s22, 0
    %p49 = por %p47, %p48
    %s51 = sadd.s32 %s50, 1
    %p54 = scmp.eq.s32.totalorder %s16, 1
    %p55 = scmp.ne.s32.totalorder %s50, %s52
    %p56 = scmp.eq.s32.totalorder %s16, 0
    %p57 = por %p55, %p56
    %p58 = scmp.ne.s32.totalorder %s50, %s52
    %p59 = scmp.eq.s32.totalorder %s21, 1
    %p60 = por %p58, %p59
    %p61 = scmp.ne.s32.totalorder %s52, %s53
    %p62 = scmp.eq.s32.totalorder %s21, 0
    %p63 = por %p61, %p62
    %p64 = scmp.ne.s32.totalorder %s52, %s53
    %p65 = scmp.eq.s32.totalorder %s22, 1
    %p66 = por %p64, %p65
    %p68 = scmp.ne.s32.totalorder %s53, %s67
    %p69 = scmp.eq.s32.totalorder %s22, 0
    %p70 = por %p68, %p69
    %s72 = sadd.s32 %s71, 1
    %p75 = scmp.eq.s32.totalorder %s16, 1
    %p76 = scmp.ne.s32.totalorder %s71, %s73
    %p77 = scmp.eq.s32.totalorder %s16, 0
    %p78 = por %p76, %p77
    %p79 = scmp.ne.s32.totalorder %s71, %s73
    %p80 = scmp.eq.s32.totalorder %s21, 1
    %p81 = por %p79, %p80
    %p82 = scmp.ne.s32.totalorder %s73, %s74
    %p83 = scmp.eq.s32.totalorder %s21, 0
    %p84 = por %p82, %p83
    %p85 = scmp.ne.s32.totalorder %s73, %s74
    %p86 = scmp.eq.s32.totalorder %s22, 1
    %p87 = por %p85, %p86
    %p89 = scmp.ne.s32.totalorder %s74, %s88
    %p90 = scmp.eq.s32.totalorder %s22, 0
    %p91 = por %p89, %p90
    %s93 = sadd.s32 %s92, 1
    %p96 = scmp.eq.s32.totalorder %s16, 1
    %p97 = scmp.ne.s32.totalorder %s92, %s94
    %p98 = scmp.eq.s32.totalorder %s16, 0
    %p99 = por %p97, %p98
    %p100 = scmp.ne.s32.totalorder %s92, %s94
    %p101 = scmp.eq.s32.totalorder %s21, 1
    %p102 = por %p100, %p101
    %p103 = scmp.ne.s32.totalorder %s94, %s95
    %p104 = scmp.eq.s32.totalorder %s21, 0
    %p105 = por %p103, %p104
    %p106 = scmp.ne.s32.totalorder %s94, %s95
    %p107 = scmp.eq.s32.totalorder %s22, 1
    %p108 = por %p106, %p107
    %p110 = scmp.ne.s32.totalorder %s95, %s109
    %p111 = scmp.eq.s32.totalorder %s22, 0
    %p112 = por %p110, %p111
    %s114 = sadd.s32 %s113, 1
    %p117 = scmp.eq.s32.totalorder %s16, 1
    %p118 = scmp.ne.s32.totalorder %s113, %s115
    %p119 = scmp.eq.s32.totalorder %s16, 0
    %p120 = por %p118, %p119
    %p121 = scmp.ne.s32.totalorder %s113, %s115
    %p122 = scmp.eq.s32.totalorder %s21, 1
    %p123 = por %p121, %p122
    %p124 = scmp.ne.s32.totalorder %s115, %s116
    %p125 = scmp.eq.s32.totalorder %s21, 0
    %p126 = por %p124, %p125
    %p127 = scmp.ne.s32.totalorder %s115, %s116
    %p128 = scmp.eq.s32.totalorder %s22, 1
    %p129 = por %p127, %p128
    %p131 = scmp.ne.s32.totalorder %s116, %s130
    %p132 = scmp.eq.s32.totalorder %s22, 0
    %p133 = por %p131, %p132
    %s135 = sadd.s32 %s134, 1
    %p138 = scmp.eq.s32.totalorder %s16, 1
    %p139 = scmp.ne.s32.totalorder %s134, %s136
    %p140 = scmp.eq.s32.totalorder %s16, 0
    %p141 = por %p139, %p140
    %p142 = scmp.ne.s32.totalorder %s134, %s136
    %p143 = scmp.eq.s32.totalorder %s21, 1
    %p144 = por %p142, %p143
    %p145 = scmp.ne.s32.totalorder %s136, %s137
    %p146 = scmp.eq.s32.totalorder %s21, 0
    %p147 = por %p145, %p146
    %p148 = scmp.ne.s32.totalorder %s136, %s137
    %p149 = scmp.eq.s32.totalorder %s22, 1
    %p150 = por %p148, %p149
    %p152 = scmp.ne.s32.totalorder %s137, %s151
    %p153 = scmp.eq.s32.totalorder %s22, 0
    %p154 = por %p152, %p153
    %s156 = sadd.s32 %s155, 1
    %p159 = scmp.eq.s32.totalorder %s16, 1
    %p160 = scmp.ne.s32.totalorder %s155, %s157
    %p161 = scmp.eq.s32.totalorder %s16, 0
    %p162 = por %p160, %p161
    %p163 = scmp.ne.s32.totalorder %s155, %s157
    %p164 = scmp.eq.s32.totalorder %s21, 1
    %p165 = por %p163, %p164
    %p166 = scmp.ne.s32.totalorder %s157, %s158
    %p167 = scmp.eq.s32.totalorder %s21, 0
    %p168 = por %p166, %p167
    %p169 = scmp.ne.s32.totalorder %s157, %s158
    %p170 = scmp.eq.s32.totalorder %s22, 1
    %p171 = por %p169, %p170
    %p173 = scmp.ne.s32.totalorder %s158, %s172
    %p174 = scmp.eq.s32.totalorder %s22, 0
    %p175 = por %p173, %p174
    %s177 = sadd.s32 %s176, 1
    %p180 = scmp.eq.s32.totalorder %s16, 1
    %p181 = scmp.ne.s32.totalorder %s176, %s178
    %p182 = scmp.eq.s32.totalorder %s16, 0
    %p183 = por %p181, %p182
    %p184 = scmp.ne.s32.totalorder %s176, %s178
    %p185 = scmp.eq.s32.totalorder %s21, 1
    %p186 = por %p184, %p185
    %p187 = scmp.ne.s32.totalorder %s178, %s179
    %p188 = scmp.eq.s32.totalorder %s21, 0
    %p189 = por %p187, %p188
    %p190 = scmp.ne.s32.totalorder %s178, %s179
    %p191 = scmp.eq.s32.totalorder %s22, 1
    %p192 = por %p190, %p191
    %p194 = scmp.ne.s32.totalorder %s179, %s193
    %p195 = scmp.eq.s32.totalorder %s22, 0
    %p196 = por %p194, %p195
    %s197 = ssub.s32 %s16, %s23
    %p198 = scmp.eq.s32.totalorder %s197, 0
    %s200 = sadd.s32 %s199, 1
    %s201 = scalar_select %p198, %s199, %s200
    %p204 = pneg %p198
    %p205 = scmp.eq.s32.totalorder %s16, 1
    %p206 = por %p204, %p205
    %p207 = scmp.ne.s32.totalorder %s199, %s202
    %p208 = scmp.eq.s32.totalorder %s16, 0
    %p209 = por %p207, %p208
    %p210 = scmp.ne.s32.totalorder %s199, %s202
    %p211 = scmp.eq.s32.totalorder %s21, 1
    %p212 = por %p210, %p211
    %p213 = scmp.ne.s32.totalorder %s202, %s203
    %p214 = scmp.eq.s32.totalorder %s21, 0
    %p215 = por %p213, %p214
    %p216 = scmp.ne.s32.totalorder %s202, %s203
    %p217 = scmp.eq.s32.totalorder %s22, 1
    %p218 = por %p216, %p217
    %p220 = scmp.ne.s32.totalorder %s203, %s219
    %p221 = scmp.eq.s32.totalorder %s22, 0
    %p222 = por %p220, %p221
    %p223 = scmp.le.s32.totalorder 1, %s16
    %p224 = scmp.lt.s32.totalorder %s16, 3
    %p225 = pnand %p223, %p224
    %p226 = pneg %p225
    // Predicated region
    $region9: #{weight_map_ft_forward.1} parent=5 // pred_check
      _
    $region10: #{weight_map_ft_forward.1} parent=5 // pred_check_branch
      %228 = sbr.rel (%p225) target = $region12
    $region11: #{weight_map_ft_forward.1} parent=5 // pred_region
      %s229 = ssub.s32 %s16, 1
      // Predicated region
      $region13: #{weight_map_ft_forward.1} parent=11 // pred_check
        %p230 = pneg %p63
      $region14: #{weight_map_ft_forward.1} parent=11 // pred_check_branch
        %232 = sbr.rel (%p230) target = $region16
      $region15: #{weight_map_ft_forward.1} parent=11 // pred_region
        _
      $region16: #{weight_map_ft_forward.1} parent=11 // pred_fallthru
        _
      // Predicated region
      $region17: #{weight_map_ft_forward.1} parent=11 // pred_check
        %p233 = pneg %p84
      $region18: #{weight_map_ft_forward.1} parent=11 // pred_check_branch
        %235 = sbr.rel (%p233) target = $region20
      $region19: #{weight_map_ft_forward.1} parent=11 // pred_region
        _
      $region20: #{weight_map_ft_forward.1} parent=11 // pred_fallthru
        _
      // Predicated region
      $region21: #{weight_map_ft_forward.1} parent=11 // pred_check
        %p236 = pneg %p105
      $region22: #{weight_map_ft_forward.1} parent=11 // pred_check_branch
        %238 = sbr.rel (%p236) target = $region24
      $region23: #{weight_map_ft_forward.1} parent=11 // pred_region
        _
      $region24: #{weight_map_ft_forward.1} parent=11 // pred_fallthru
        _
      // Predicated region
      $region25: #{weight_map_ft_forward.1} parent=11 // pred_check
        %p239 = pneg %p126
      $region26: #{weight_map_ft_forward.1} parent=11 // pred_check_branch
        %241 = sbr.rel (%p239) target = $region28
      $region27: #{weight_map_ft_forward.1} parent=11 // pred_region
        _
      $region28: #{weight_map_ft_forward.1} parent=11 // pred_fallthru
        _
      // Predicated region
      $region29: #{weight_map_ft_forward.1} parent=11 // pred_check
        %p242 = pneg %p147
      $region30: #{weight_map_ft_forward.1} parent=11 // pred_check_branch
        %244 = sbr.rel (%p242) target = $region32
      $region31: #{weight_map_ft_forward.1} parent=11 // pred_region
        _
      $region32: #{weight_map_ft_forward.1} parent=11 // pred_fallthru
        _
      // Predicated region
      $region33: #{weight_map_ft_forward.1} parent=11 // pred_check
        %p245 = pneg %p168
      $region34: #{weight_map_ft_forward.1} parent=11 // pred_check_branch
        %247 = sbr.rel (%p245) target = $region36
      $region35: #{weight_map_ft_forward.1} parent=11 // pred_region
        _
      $region36: #{weight_map_ft_forward.1} parent=11 // pred_fallthru
        _
      // Predicated region
      $region37: #{weight_map_ft_forward.1} parent=11 // pred_check
        %p248 = pneg %p189
      $region38: #{weight_map_ft_forward.1} parent=11 // pred_check_branch
        %250 = sbr.rel (%p248) target = $region40
      $region39: #{weight_map_ft_forward.1} parent=11 // pred_region
        _
      $region40: #{weight_map_ft_forward.1} parent=11 // pred_fallthru
        _
    $region12: #{weight_map_ft_forward.1} parent=5 // pred_fallthru
      _
    %p251 = scmp.lt.s32.totalorder %s16, 2
    // Predicated region
    $region41: #{weight_map_ft_forward.1} parent=5 // pred_check
      %p252 = pneg %p251
    $region42: #{weight_map_ft_forward.1} parent=5 // pred_check_branch
      %254 = sbr.rel (%p252) target = $region44
    $region43: #{weight_map_ft_forward.1} parent=5 // pred_region
      // Predicated region
      $region45: #{weight_map_ft_forward.1} parent=43 // pred_check
        %p255 = pneg %p36
      $region46: #{weight_map_ft_forward.1} parent=43 // pred_check_branch
        %257 = sbr.rel (%p255) target = $region48
      $region47: #{weight_map_ft_forward.1} parent=43 // pred_region
        %p258 = scmp.lt.s32.totalorder %s16, 1
        %s259 = scalar_select %p258, %s16, 1
        %s260 = smul.addr %s259, 2
        %s261 = scalar_lea.vmem %s0, %s260
      $region48: #{weight_map_ft_forward.1} parent=43 // pred_fallthru
        _
    $region44: #{weight_map_ft_forward.1} parent=5 // pred_fallthru
      _
    %p262 = scmp.le.s32.totalorder 1, %s16
    %p263 = scmp.lt.s32.totalorder %s16, 3
    %p264 = pnand %p262, %p263
    %p265 = pneg %p264
    // Predicated region
    $region49: #{weight_map_ft_forward.1} parent=5 // pred_check
      _
    $region50: #{weight_map_ft_forward.1} parent=5 // pred_check_branch
      %267 = sbr.rel (%p264) target = $region52
    $region51: #{weight_map_ft_forward.1} parent=5 // pred_region
      %s268 = ssub.s32 %s16, 1
      %p269 = scmp.lt.s32.totalorder %s21, 1
      %s270 = scalar_select %p269, %s21, 1
      %s271 = smul.addr %s270, 2
      %s272 = scalar_lea.vmem %s0, %s271
      %p273 = pneg %p42
      %p274 = pneg %p39
      %p275 = pneg %p63
      %p276 = pneg %p60
      %p277 = pneg %p84
      %p278 = pneg %p81
      %p279 = pneg %p105
      %p280 = pneg %p102
      %p281 = pneg %p126
      %p282 = pneg %p123
      %p283 = pneg %p147
      %p284 = pneg %p144
      %p285 = pneg %p168
      %p286 = pneg %p165
      %p287 = pneg %p189
      %p288 = pneg %p186
      %p289 = pneg %p215
      %p290 = pneg %p212
      %p291 = scmp.lt.s32.totalorder %s21, 1
      %s292 = scalar_select %p291, %s21, 1
      %s293 = smul.addr %s292, 2
      %s294 = scalar_lea.vmem %s8, %s293
      %p295 = scmp.lt.s32.totalorder %s21, 1
      %s296 = scalar_select %p295, %s21, 1
      %s297 = smul.addr %s296, 2
      %s298 = scalar_lea.vmem %s0, %s297
      %p299 = scmp.lt.s32.totalorder %s21, 1
      %s300 = scalar_select %p299, %s21, 1
      %s301 = smul.addr %s300, 2
      %s302 = scalar_lea.vmem %s8, %s301
      %v303 = vld [vmem:[%s1] sm:$0xff]
      %v304 = vld [vmem:[%s1 + $0x8] sm:$0xff]
      %v305 = vld [vmem:[%s1 + $0x10] sm:$0x1]
      %v306 = vld [vmem:[%s1 + $0x18] sm:$0x1]
      %v307 = vld [vmem:[%s2] sm:$0xff]
      %v308 = vld [vmem:[%s2 + $0x8] sm:$0xff]
      %v309 = vld [vmem:[%s3] sm:$0xff]
      %v310 = vld [vmem:[%s3 + $0x8] sm:$0xff]
      %v311 = vld [vmem:[%s4] sm:$0xff]
      %v312 = vld [vmem:[%s4 + $0x8] sm:$0xff]
      %v313 = vld [vmem:[%s4 + $0x10] sm:$0xff]
      %v314 = vld [vmem:[%s4 + $0x18] sm:$0xff]
      %v315 = vld [vmem:[%s5] sm:$0xff]
      %v316 = vld [vmem:[%s5 + $0x8] sm:$0xff]
      %v317 = vld [vmem:[%s6] sm:$0xff]
      %v318 = vld [vmem:[%s6 + $0x8] sm:$0xff]
      %v319 = vld [vmem:[#allocation2] sm:$0x1]
      %v320 = vld [vmem:[%s298] sm:$0x3]
      %v322 = vlaneseq
      %v323 = vshrl.u32 %v322, 7
      %v324 = vsub.s32 0, %v323
      %v325 = vrot.slane %v320, %v324
      %v326 = vlaneseq
      %v327 = vshrl.u32 %v326, 7
      %v328 = vsub.s32 1, %v327
      %v329 = vrot.slane %v320, %v328
      %332 = vrot.lane.b32.xlu0 %v325, 17
      %v333 = vpop.permute.xlu0 %332
      %334 = vrot.lane.b32.xlu0 %v329, 17
      %v335 = vpop.permute.xlu0 %334
      %v336 = vlaneseq
      %v337 = vand.u32 %v336, 127
      %vm338 = vcmp.lt.s32.totalorder %v337, 17
      %v339 = vsel %vm338, %v333, %v335
      %v340 = vsel %vm338, %v335, %v333
      %v341 = vmul.f32 %v340, %v303
      %v342 = vmul.f32 %v339, %v304
      %343 = vrot.lane.b32.xlu0 %v325, 16
      %v344 = vpop.permute.xlu0 %343
      %345 = vrot.lane.b32.xlu0 %v329, 16
      %v346 = vpop.permute.xlu0 %345
      %vm347 = vcmp.lt.s32.totalorder %v337, 16
      %v348 = vsel %vm347, %v344, %v346
      %v349 = vsel %vm347, %v346, %v344
      %v352 = vrot.slane %v303, 1
      %v353 = vrot.slane %v304, 1
      %v356 = vmul.f32 %v349, %v352
      %v357 = vmul.f32 %v348, %v353
      %358 = vrot.lane.b32.xlu0 %v325, 15
      %v359 = vpop.permute.xlu0 %358
      %360 = vrot.lane.b32.xlu0 %v329, 15
      %v361 = vpop.permute.xlu0 %360
      %vm362 = vcmp.lt.s32.totalorder %v337, 15
      %v363 = vsel %vm362, %v359, %v361
      %v364 = vsel %vm362, %v361, %v359
      %v365 = vrot.slane %v303, 2
      %v366 = vrot.slane %v304, 2
      %v369 = vmul.f32 %v364, %v365
      %v370 = vmul.f32 %v363, %v366
      %371 = vrot.lane.b32.xlu0 %v325, 1
      %v372 = vpop.permute.xlu0 %371
      %373 = vrot.lane.b32.xlu0 %v329, 1
      %v374 = vpop.permute.xlu0 %373
      %vm375 = vcmp.lt.s32.totalorder %v337, 1
      %v376 = vsel %vm375, %v372, %v374
      %v377 = vsel %vm375, %v374, %v372
      %v378 = vrot.slane %v303, 3
      %v379 = vrot.slane %v304, 3
      %v382 = vmul.f32 %v377, %v378
      %v383 = vmul.f32 %v376, %v379
      %384 = vrot.lane.b32.xlu0 %v325, 127
      %v385 = vpop.permute.xlu0 %384
      %386 = vrot.lane.b32.xlu0 %v329, 127
      %v387 = vpop.permute.xlu0 %386
      %vm388 = vcmp.lt.s32.totalorder %v337, 127
      %v389 = vsel %vm388, %v385, %v387
      %v390 = vsel %vm388, %v387, %v385
      %v391 = vrot.slane %v303, 5
      %v392 = vrot.slane %v304, 5
      %v395 = vmul.f32 %v389, %v391
      %v396 = vmul.f32 %v390, %v392
      %397 = vrot.lane.b32.xlu0 %v325, 113
      %v398 = vpop.permute.xlu0 %397
      %399 = vrot.lane.b32.xlu0 %v329, 113
      %v400 = vpop.permute.xlu0 %399
      %vm401 = vcmp.lt.s32.totalorder %v337, 113
      %v402 = vsel %vm401, %v398, %v400
      %v403 = vsel %vm401, %v400, %v398
      %v404 = vrot.slane %v303, 6
      %v405 = vrot.slane %v304, 6
      %v408 = vmul.f32 %v402, %v404
      %v409 = vmul.f32 %v403, %v405
      %410 = vrot.lane.b32.xlu0 %v325, 112
      %v411 = vpop.permute.xlu0 %410
      %412 = vrot.lane.b32.xlu0 %v329, 112
      %v413 = vpop.permute.xlu0 %412
      %vm414 = vcmp.lt.s32.totalorder %v337, 112
      %v415 = vsel %vm414, %v411, %v413
      %v416 = vsel %vm414, %v413, %v411
      %v417 = vrot.slane %v303, 7
      %v418 = vrot.slane %v304, 7
      %v421 = vmul.f32 %v415, %v417
      %v422 = vmul.f32 %v416, %v418
      %423 = vrot.lane.b32.xlu0 %v325, 111
      %v424 = vpop.permute.xlu0 %423
      %425 = vrot.lane.b32.xlu0 %v329, 111
      %v426 = vpop.permute.xlu0 %425
      %vm427 = vcmp.lt.s32.totalorder %v337, 111
      %v428 = vsel %vm427, %v424, %v426
      %v429 = vsel %vm427, %v426, %v424
      %v430 = vmul.f32 %v428, %v305
      %v431 = vmul.f32 %v429, %v306
      %433 = vset.pattern.permute.xlu0 0
      %434 = vperm.xlu0 %433, %v307
      %v435 = vpop.permute.xlu0 %434
      %438 = vset.pattern.permute.xlu0 0
      %439 = vperm.xlu0 %438, %v308
      %v440 = vpop.permute.xlu0 %439
      %v442 = vlaneseq
      %v443 = vshrl.u32 %v442, 7
      %v444 = vsub.s32 0, %v443
      %v445 = vrot.slane %v341, %v444
      %v446 = vlaneseq
      %v447 = vshrl.u32 %v446, 7
      %v448 = vsub.s32 0, %v447
      %v449 = vrot.slane %v342, %v448
      %v450 = vmul.f32 %v435, %v445
      %v451 = vmul.f32 %v435, %v449
      %v452 = vmul.f32 %v440, %v445
      %v453 = vmul.f32 %v440, %v449
      %455 = vset.pattern.permute.xlu0 0
      %456 = vperm.xlu0 %455, %v309
      %v457 = vpop.permute.xlu0 %456
      %460 = vset.pattern.permute.xlu0 0
      %461 = vperm.xlu0 %460, %v310
      %v462 = vpop.permute.xlu0 %461
      %v464 = vadd.f32 %v457, %v450
      %v465 = vadd.f32 %v457, %v451
      %v466 = vadd.f32 %v462, %v452
      %v467 = vadd.f32 %v462, %v453
      %468 = vset.pattern.permute.xlu0 1
      %469 = vperm.xlu0 %468, %v307
      %v470 = vpop.permute.xlu0 %469
      %472 = vset.pattern.permute.xlu0 1
      %473 = vperm.xlu0 %472, %v308
      %v474 = vpop.permute.xlu0 %473
      %v476 = vlaneseq
      %v477 = vshrl.u32 %v476, 7
      %v478 = vsub.s32 0, %v477
      %v479 = vrot.slane %v356, %v478
      %v480 = vlaneseq
      %v481 = vshrl.u32 %v480, 7
      %v482 = vsub.s32 0, %v481
      %v483 = vrot.slane %v357, %v482
      %v484 = vmul.f32 %v470, %v479
      %v485 = vmul.f32 %v470, %v483
      %v486 = vmul.f32 %v474, %v479
      %v487 = vmul.f32 %v474, %v483
      %v488 = vadd.f32 %v464, %v484
      %v489 = vadd.f32 %v465, %v485
      %v490 = vadd.f32 %v466, %v486
      %v491 = vadd.f32 %v467, %v487
      %492 = vset.pattern.permute.xlu0 2
      %493 = vperm.xlu0 %492, %v307
      %v494 = vpop.permute.xlu0 %493
      %496 = vset.pattern.permute.xlu0 2
      %497 = vperm.xlu0 %496, %v308
      %v498 = vpop.permute.xlu0 %497
      %v500 = vlaneseq
      %v501 = vshrl.u32 %v500, 7
      %v502 = vsub.s32 0, %v501
      %v503 = vrot.slane %v369, %v502
      %v504 = vlaneseq
      %v505 = vshrl.u32 %v504, 7
      %v506 = vsub.s32 0, %v505
      %v507 = vrot.slane %v370, %v506
      %v508 = vmul.f32 %v494, %v503
      %v509 = vmul.f32 %v494, %v507
      %v510 = vmul.f32 %v498, %v503
      %v511 = vmul.f32 %v498, %v507
      %v512 = vadd.f32 %v488, %v508
      %v513 = vadd.f32 %v489, %v509
      %v514 = vadd.f32 %v490, %v510
      %v515 = vadd.f32 %v491, %v511
      %516 = vset.pattern.permute.xlu0 3
      %517 = vperm.xlu0 %516, %v307
      %v518 = vpop.permute.xlu0 %517
      %520 = vset.pattern.permute.xlu0 3
      %521 = vperm.xlu0 %520, %v308
      %v522 = vpop.permute.xlu0 %521
      %v524 = vlaneseq
      %v525 = vshrl.u32 %v524, 7
      %v526 = vsub.s32 0, %v525
      %v527 = vrot.slane %v382, %v526
      %v528 = vlaneseq
      %v529 = vshrl.u32 %v528, 7
      %v530 = vsub.s32 0, %v529
      %v531 = vrot.slane %v383, %v530
      %v532 = vmul.f32 %v518, %v527
      %v533 = vmul.f32 %v518, %v531
      %v534 = vmul.f32 %v522, %v527
      %v535 = vmul.f32 %v522, %v531
      %v536 = vadd.f32 %v512, %v532
      %v537 = vadd.f32 %v513, %v533
      %v538 = vadd.f32 %v514, %v534
      %v539 = vadd.f32 %v515, %v535
      %540 = vset.pattern.permute.xlu0 4
      %541 = vperm.xlu0 %540, %v307
      %v542 = vpop.permute.xlu0 %541
      %544 = vset.pattern.permute.xlu0 4
      %545 = vperm.xlu0 %544, %v308
      %v546 = vpop.permute.xlu0 %545
      %v548 = vmul.f32 %v542, %v325
      %v549 = vmul.f32 %v542, %v329
      %v550 = vmul.f32 %v546, %v325
      %v551 = vmul.f32 %v546, %v329
      %v552 = vadd.f32 %v536, %v548
      %v553 = vadd.f32 %v537, %v549
      %v554 = vadd.f32 %v538, %v550
      %v555 = vadd.f32 %v539, %v551
      %556 = vset.pattern.permute.xlu0 5
      %557 = vperm.xlu0 %556, %v307
      %v558 = vpop.permute.xlu0 %557
      %560 = vset.pattern.permute.xlu0 5
      %561 = vperm.xlu0 %560, %v308
      %v562 = vpop.permute.xlu0 %561
      %v564 = vlaneseq
      %v565 = vshrl.u32 %v564, 7
      %v566 = vsub.s32 0, %v565
      %v567 = vrot.slane %v395, %v566
      %v568 = vlaneseq
      %v569 = vshrl.u32 %v568, 7
      %v570 = vsub.s32 0, %v569
      %v571 = vrot.slane %v396, %v570
      %v572 = vmul.f32 %v558, %v567
      %v573 = vmul.f32 %v558, %v571
      %v574 = vmul.f32 %v562, %v567
      %v575 = vmul.f32 %v562, %v571
      %v576 = vadd.f32 %v552, %v572
      %v577 = vadd.f32 %v553, %v573
      %v578 = vadd.f32 %v554, %v574
      %v579 = vadd.f32 %v555, %v575
      %580 = vset.pattern.permute.xlu0 6
      %581 = vperm.xlu0 %580, %v307
      %v582 = vpop.permute.xlu0 %581
      %584 = vset.pattern.permute.xlu0 6
      %585 = vperm.xlu0 %584, %v308
      %v586 = vpop.permute.xlu0 %585
      %v588 = vlaneseq
      %v589 = vshrl.u32 %v588, 7
      %v590 = vsub.s32 0, %v589
      %v591 = vrot.slane %v408, %v590
      %v592 = vlaneseq
      %v593 = vshrl.u32 %v592, 7
      %v594 = vsub.s32 0, %v593
      %v595 = vrot.slane %v409, %v594
      %v596 = vmul.f32 %v582, %v591
      %v597 = vmul.f32 %v582, %v595
      %v598 = vmul.f32 %v586, %v591
      %v599 = vmul.f32 %v586, %v595
      %v600 = vadd.f32 %v576, %v596
      %v601 = vadd.f32 %v577, %v597
      %v602 = vadd.f32 %v578, %v598
      %v603 = vadd.f32 %v579, %v599
      %604 = vset.pattern.permute.xlu0 7
      %605 = vperm.xlu0 %604, %v307
      %v606 = vpop.permute.xlu0 %605
      %608 = vset.pattern.permute.xlu0 7
      %609 = vperm.xlu0 %608, %v308
      %v610 = vpop.permute.xlu0 %609
      %v612 = vlaneseq
      %v613 = vshrl.u32 %v612, 7
      %v614 = vsub.s32 0, %v613
      %v615 = vrot.slane %v421, %v614
      %v616 = vlaneseq
      %v617 = vshrl.u32 %v616, 7
      %v618 = vsub.s32 0, %v617
      %v619 = vrot.slane %v422, %v618
      %v620 = vmul.f32 %v606, %v615
      %v621 = vmul.f32 %v606, %v619
      %v622 = vmul.f32 %v610, %v615
      %v623 = vmul.f32 %v610, %v619
      %v624 = vadd.f32 %v600, %v620
      %v625 = vadd.f32 %v601, %v621
      %v626 = vadd.f32 %v602, %v622
      %v627 = vadd.f32 %v603, %v623
      %628 = vset.pattern.permute.xlu0 8
      %629 = vperm.xlu0 %628, %v307
      %v630 = vpop.permute.xlu0 %629
      %632 = vset.pattern.permute.xlu0 8
      %633 = vperm.xlu0 %632, %v308
      %v634 = vpop.permute.xlu0 %633
      %v636 = vlaneseq
      %v637 = vshrl.u32 %v636, 7
      %v638 = vsub.s32 0, %v637
      %v639 = vrot.slane %v430, %v638
      %v640 = vlaneseq
      %v641 = vshrl.u32 %v640, 7
      %v642 = vsub.s32 0, %v641
      %v643 = vrot.slane %v431, %v642
      %v644 = vmul.f32 %v630, %v639
      %v645 = vmul.f32 %v630, %v643
      %v646 = vmul.f32 %v634, %v639
      %v647 = vmul.f32 %v634, %v643
      %v648 = vadd.f32 %v624, %v644
      %v649 = vadd.f32 %v625, %v645
      %v650 = vadd.f32 %v626, %v646
      %v651 = vadd.f32 %v627, %v647
      %652 = vrot.lane.b32.xlu0 %v648, 17
      %v653 = vpop.permute.xlu0 %652
      %654 = vrot.lane.b32.xlu0 %v650, 17
      %v655 = vpop.permute.xlu0 %654
      %656 = vrot.lane.b32.xlu0 %v649, 17
      %v657 = vpop.permute.xlu0 %656
      %658 = vrot.lane.b32.xlu0 %v651, 17
      %v659 = vpop.permute.xlu0 %658
      %v660 = vsel %vm338, %v653, %v657
      %v661 = vsel %vm338, %v655, %v659
      %v662 = vsel %vm338, %v657, %v653
      %v663 = vsel %vm338, %v659, %v655
      %v664 = vlaneseq
      %v665 = vshrl.u32 %v664, 7
      %v666 = vsub.s32 0, %v665
      %v667 = vrot.slane %v303, %v666
      %v668 = vlaneseq
      %v669 = vshrl.u32 %v668, 7
      %v670 = vsub.s32 0, %v669
      %v671 = vrot.slane %v304, %v670
      %v672 = vmul.f32 %v662, %v667
      %v673 = vmul.f32 %v660, %v671
      %v674 = vmul.f32 %v663, %v667
      %v675 = vmul.f32 %v661, %v671
      %676 = vrot.lane.b32.xlu0 %v648, 16
      %v677 = vpop.permute.xlu0 %676
      %678 = vrot.lane.b32.xlu0 %v650, 16
      %v679 = vpop.permute.xlu0 %678
      %680 = vrot.lane.b32.xlu0 %v649, 16
      %v681 = vpop.permute.xlu0 %680
      %682 = vrot.lane.b32.xlu0 %v651, 16
      %v683 = vpop.permute.xlu0 %682
      %v684 = vsel %vm347, %v677, %v681
      %v685 = vsel %vm347, %v679, %v683
      %v686 = vsel %vm347, %v681, %v677
      %v687 = vsel %vm347, %v683, %v679
      %v688 = vlaneseq
      %v689 = vshrl.u32 %v688, 7
      %v690 = vsub.s32 1, %v689
      %v691 = vrot.slane %v303, %v690
      %v692 = vlaneseq
      %v693 = vshrl.u32 %v692, 7
      %v694 = vsub.s32 1, %v693
      %v695 = vrot.slane %v304, %v694
      %v696 = vmul.f32 %v686, %v691
      %v697 = vmul.f32 %v684, %v695
      %v698 = vmul.f32 %v687, %v691
      %v699 = vmul.f32 %v685, %v695
      %700 = vrot.lane.b32.xlu0 %v648, 15
      %v701 = vpop.permute.xlu0 %700
      %702 = vrot.lane.b32.xlu0 %v650, 15
      %v703 = vpop.permute.xlu0 %702
      %704 = vrot.lane.b32.xlu0 %v649, 15
      %v705 = vpop.permute.xlu0 %704
      %706 = vrot.lane.b32.xlu0 %v651, 15
      %v707 = vpop.permute.xlu0 %706
      %v708 = vsel %vm362, %v701, %v705
      %v709 = vsel %vm362, %v703, %v707
      %v710 = vsel %vm362, %v705, %v701
      %v711 = vsel %vm362, %v707, %v703
      %v712 = vlaneseq
      %v713 = vshrl.u32 %v712, 7
      %v714 = vsub.s32 2, %v713
      %v715 = vrot.slane %v303, %v714
      %v716 = vlaneseq
      %v717 = vshrl.u32 %v716, 7
      %v718 = vsub.s32 2, %v717
      %v719 = vrot.slane %v304, %v718
      %v720 = vmul.f32 %v710, %v715
      %v721 = vmul.f32 %v708, %v719
      %v722 = vmul.f32 %v711, %v715
      %v723 = vmul.f32 %v709, %v719
      %724 = vrot.lane.b32.xlu0 %v648, 1
      %v725 = vpop.permute.xlu0 %724
      %726 = vrot.lane.b32.xlu0 %v650, 1
      %v727 = vpop.permute.xlu0 %726
      %728 = vrot.lane.b32.xlu0 %v649, 1
      %v729 = vpop.permute.xlu0 %728
      %730 = vrot.lane.b32.xlu0 %v651, 1
      %v731 = vpop.permute.xlu0 %730
      %v732 = vsel %vm375, %v725, %v729
      %v733 = vsel %vm375, %v727, %v731
      %v734 = vsel %vm375, %v729, %v725
      %v735 = vsel %vm375, %v731, %v727
      %v736 = vlaneseq
      %v737 = vshrl.u32 %v736, 7
      %v738 = vsub.s32 3, %v737
      %v739 = vrot.slane %v303, %v738
      %v740 = vlaneseq
      %v741 = vshrl.u32 %v740, 7
      %v742 = vsub.s32 3, %v741
      %v743 = vrot.slane %v304, %v742
      %v744 = vmul.f32 %v734, %v739
      %v745 = vmul.f32 %v732, %v743
      %v746 = vmul.f32 %v735, %v739
      %v747 = vmul.f32 %v733, %v743
      %748 = vrot.lane.b32.xlu0 %v648, 127
      %v749 = vpop.permute.xlu0 %748
      %750 = vrot.lane.b32.xlu0 %v650, 127
      %v751 = vpop.permute.xlu0 %750
      %752 = vrot.lane.b32.xlu0 %v649, 127
      %v753 = vpop.permute.xlu0 %752
      %754 = vrot.lane.b32.xlu0 %v651, 127
      %v755 = vpop.permute.xlu0 %754
      %v756 = vsel %vm388, %v749, %v753
      %v757 = vsel %vm388, %v751, %v755
      %v758 = vsel %vm388, %v753, %v749
      %v759 = vsel %vm388, %v755, %v751
      %v760 = vlaneseq
      %v761 = vshrl.u32 %v760, 7
      %v762 = vsub.s32 5, %v761
      %v763 = vrot.slane %v303, %v762
      %v764 = vlaneseq
      %v765 = vshrl.u32 %v764, 7
      %v766 = vsub.s32 5, %v765
      %v767 = vrot.slane %v304, %v766
      %v768 = vmul.f32 %v756, %v763
      %v769 = vmul.f32 %v758, %v767
      %v770 = vmul.f32 %v757, %v763
      %v771 = vmul.f32 %v759, %v767
      %772 = vrot.lane.b32.xlu0 %v648, 113
      %v773 = vpop.permute.xlu0 %772
      %774 = vrot.lane.b32.xlu0 %v650, 113
      %v775 = vpop.permute.xlu0 %774
      %776 = vrot.lane.b32.xlu0 %v649, 113
      %v777 = vpop.permute.xlu0 %776
      %778 = vrot.lane.b32.xlu0 %v651, 113
      %v779 = vpop.permute.xlu0 %778
      %v780 = vsel %vm401, %v773, %v777
      %v781 = vsel %vm401, %v775, %v779
      %v782 = vsel %vm401, %v777, %v773
      %v783 = vsel %vm401, %v779, %v775
      %v784 = vlaneseq
      %v785 = vshrl.u32 %v784, 7
      %v786 = vsub.s32 6, %v785
      %v787 = vrot.slane %v303, %v786
      %v788 = vlaneseq
      %v789 = vshrl.u32 %v788, 7
      %v790 = vsub.s32 6, %v789
      %v791 = vrot.slane %v304, %v790
      %v792 = vmul.f32 %v780, %v787
      %v793 = vmul.f32 %v782, %v791
      %v794 = vmul.f32 %v781, %v787
      %v795 = vmul.f32 %v783, %v791
      %796 = vrot.lane.b32.xlu0 %v648, 112
      %v797 = vpop.permute.xlu0 %796
      %798 = vrot.lane.b32.xlu0 %v650, 112
      %v799 = vpop.permute.xlu0 %798
      %800 = vrot.lane.b32.xlu0 %v649, 112
      %v801 = vpop.permute.xlu0 %800
      %802 = vrot.lane.b32.xlu0 %v651, 112
      %v803 = vpop.permute.xlu0 %802
      %v804 = vsel %vm414, %v797, %v801
      %v805 = vsel %vm414, %v799, %v803
      %v806 = vsel %vm414, %v801, %v797
      %v807 = vsel %vm414, %v803, %v799
      %v808 = vlaneseq
      %v809 = vshrl.u32 %v808, 7
      %v810 = vsub.s32 7, %v809
      %v811 = vrot.slane %v303, %v810
      %v812 = vlaneseq
      %v813 = vshrl.u32 %v812, 7
      %v814 = vsub.s32 7, %v813
      %v815 = vrot.slane %v304, %v814
      %v816 = vmul.f32 %v804, %v811
      %v817 = vmul.f32 %v806, %v815
      %v818 = vmul.f32 %v805, %v811
      %v819 = vmul.f32 %v807, %v815
      %820 = vrot.lane.b32.xlu0 %v648, 111
      %v821 = vpop.permute.xlu0 %820
      %822 = vrot.lane.b32.xlu0 %v650, 111
      %v823 = vpop.permute.xlu0 %822
      %824 = vrot.lane.b32.xlu0 %v649, 111
      %v825 = vpop.permute.xlu0 %824
      %826 = vrot.lane.b32.xlu0 %v651, 111
      %v827 = vpop.permute.xlu0 %826
      %v828 = vsel %vm427, %v821, %v825
      %v829 = vsel %vm427, %v823, %v827
      %v830 = vsel %vm427, %v825, %v821
      %v831 = vsel %vm427, %v827, %v823
      %v832 = vlaneseq
      %v833 = vshrl.u32 %v832, 7
      %v834 = vsub.s32 0, %v833
      %v835 = vrot.slane %v305, %v834
      %v836 = vlaneseq
      %v837 = vshrl.u32 %v836, 7
      %v838 = vsub.s32 0, %v837
      %v839 = vrot.slane %v306, %v838
      %v840 = vmul.f32 %v828, %v835
      %v841 = vmul.f32 %v830, %v839
      %v842 = vmul.f32 %v829, %v835
      %v843 = vmul.f32 %v831, %v839
      %vm844 = vcmask 130048
      %v846 = vsel %vm844, %v311, 0
      %v849 = vsel %vm844, %v313, 0
      %851 = vmatprep.subr.mxu0 0.0
      %852 = vmatpush1.msra.mxu0 0.0
      %853 = vmatprep.subr.mxu0 0.0
      %854 = vmatpush1.msra.mxu0 0.0
      %855 = vmatprep.subr.mxu0 0.0
      %856 = vmatpush1.msra.mxu0 0.0
      %857 = vmatprep.subr.mxu0 0.0
      %858 = vmatpush1.msra.mxu0 0.0
      %859 = vmatprep.subr.mxu0 0.0
      %860 = vmatpush1.msra.mxu0 0.0
      %861 = vmatprep.subr.mxu0 0.0
      %862 = vmatpush1.msra.mxu0 0.0
      %863 = vmatprep.subr.mxu0 0.0
      %864 = vmatpush1.msra.mxu0 0.0
      %865 = vmatprep.subr.mxu0 0.0
      %866 = vmatpush1.msra.mxu0 0.0
      %867 = vmatprep.subr.mxu0 0.0
      %868 = vmatpush1.msra.mxu0 0.0
      %869 = vmatprep.subr.mxu0 0.0
      %870 = vmatpush1.msra.mxu0 0.0
      %871 = vmatprep.subr.mxu0 0.0
      %872 = vmatpush1.msra.mxu0 0.0
      %873 = vmatprep.subr.mxu0 0.0
      %874 = vmatpush1.msra.mxu0 0.0
      %875 = vmatprep.subr.mxu0 0.0
      %876 = vmatpush1.msra.mxu0 0.0
      %877 = vmatprep.subr.mxu0 0.0
      %878 = vmatpush1.msra.mxu0 0.0
      %879 = vmatprep.subr.mxu0 %v675
      %880 = vmatpush1.msra.mxu0 %v674
      %881 = vmatprep.subr.mxu0 %v673
      %882 = vmatpush1.msra.mxu0 %v672
      %883 = vmatprep.subr.mxu0 0.0
      %884 = vmatpush2.msra.mxu0 0.0
      %885 = vmatprep.subr.mxu0 0.0
      %886 = vmatpush2.msra.mxu0 0.0
      %887 = vmatprep.subr.mxu0 0.0
      %888 = vmatpush2.msra.mxu0 0.0
      %889 = vmatprep.subr.mxu0 0.0
      %890 = vmatpush2.msra.mxu0 0.0
      %891 = vmatprep.subr.mxu0 0.0
      %892 = vmatpush2.msra.mxu0 0.0
      %893 = vmatprep.subr.mxu0 0.0
      %894 = vmatpush2.msra.mxu0 0.0
      %895 = vmatprep.subr.mxu0 0.0
      %896 = vmatpush2.msra.mxu0 0.0
      %897 = vmatprep.subr.mxu0 0.0
      %898 = vmatpush2.msra.mxu0 0.0
      %899 = vmatprep.subr.mxu0 0.0
      %900 = vmatpush2.msra.mxu0 0.0
      %901 = vmatprep.subr.mxu0 0.0
      %902 = vmatpush2.msra.mxu0 0.0
      %903 = vmatprep.subr.mxu0 0.0
      %904 = vmatpush2.msra.mxu0 0.0
      %905 = vmatprep.subr.mxu0 0.0
      %906 = vmatpush2.msra.mxu0 0.0
      %907 = vmatprep.subr.mxu0 0.0
      %908 = vmatpush2.msra.mxu0 0.0
      %909 = vmatprep.subr.mxu0 0.0
      %910 = vmatpush2.msra.mxu0 0.0
      %911 = vmatprep.subr.mxu0 0.0
      %912 = vmatpush2.msra.mxu0 0.0
      %913 = vmatprep.subr.mxu0 0.0
      %914 = vmatpush2.msra.mxu0 0.0
      %915 = vmatprep.mubr.f32.mxu0 0.0
      %916 = vmatmul.mubr.f32.gmra.mxu0 %v846
      %v917 = vpop.f32.mrf.mxu0
      %v918 = vadd.f32 0.0, %v917
      %v919 = vpop.f32.mrf.mxu0
      %v920 = vadd.f32 0.0, %v919
      %921 = vmatprep.mubr.f32.mxu0 0.0
      %922 = vmatmul.mubr.f32.gmra.mxu0 %v849
      %v923 = vpop.f32.mrf.mxu0
      %v924 = vadd.f32 0.0, %v923
      %v925 = vpop.f32.mrf.mxu0
      %v926 = vadd.f32 0.0, %v925
      %927 = vdwg.mxu0
      %929 = vset.pattern.permute.xlu0 0
      %930 = vperm.xlu0 %929, %v315
      %v931 = vpop.permute.xlu0 %930
      %934 = vset.pattern.permute.xlu0 0
      %935 = vperm.xlu0 %934, %v316
      %v936 = vpop.permute.xlu0 %935
      %v938 = vadd.f32 %v931, %v918
      %v939 = vadd.f32 %v931, %v920
      %v940 = vadd.f32 %v936, %v924
      %v941 = vadd.f32 %v936, %v926
      %942 = vrot.lane.b32.xlu0 %v311, 112
      %v943 = vpop.permute.xlu0 %942
      %944 = vrot.lane.b32.xlu0 %v313, 112
      %v945 = vpop.permute.xlu0 %944
      %v946 = vsel %vm844, %v943, 0
      %v948 = vsel %vm844, %v945, 0
      %950 = vmatprep.subr.mxu0 0.0
      %951 = vmatpush1.msra.mxu0 0.0
      %952 = vmatprep.subr.mxu0 0.0
      %953 = vmatpush1.msra.mxu0 0.0
      %954 = vmatprep.subr.mxu0 0.0
      %955 = vmatpush1.msra.mxu0 0.0
      %956 = vmatprep.subr.mxu0 0.0
      %957 = vmatpush1.msra.mxu0 0.0
      %958 = vmatprep.subr.mxu0 0.0
      %959 = vmatpush1.msra.mxu0 0.0
      %960 = vmatprep.subr.mxu0 0.0
      %961 = vmatpush1.msra.mxu0 0.0
      %962 = vmatprep.subr.mxu0 0.0
      %963 = vmatpush1.msra.mxu0 0.0
      %964 = vmatprep.subr.mxu0 0.0
      %965 = vmatpush1.msra.mxu0 0.0
      %966 = vmatprep.subr.mxu0 0.0
      %967 = vmatpush1.msra.mxu0 0.0
      %968 = vmatprep.subr.mxu0 0.0
      %969 = vmatpush1.msra.mxu0 0.0
      %970 = vmatprep.subr.mxu0 0.0
      %971 = vmatpush1.msra.mxu0 0.0
      %972 = vmatprep.subr.mxu0 0.0
      %973 = vmatpush1.msra.mxu0 0.0
      %974 = vmatprep.subr.mxu0 0.0
      %975 = vmatpush1.msra.mxu0 0.0
      %976 = vmatprep.subr.mxu0 0.0
      %977 = vmatpush1.msra.mxu0 0.0
      %978 = vmatprep.subr.mxu0 %v699
      %979 = vmatpush1.msra.mxu0 %v698
      %980 = vmatprep.subr.mxu0 %v697
      %981 = vmatpush1.msra.mxu0 %v696
      %982 = vmatprep.subr.mxu0 0.0
      %983 = vmatpush2.msra.mxu0 0.0
      %984 = vmatprep.subr.mxu0 0.0
      %985 = vmatpush2.msra.mxu0 0.0
      %986 = vmatprep.subr.mxu0 0.0
      %987 = vmatpush2.msra.mxu0 0.0
      %988 = vmatprep.subr.mxu0 0.0
      %989 = vmatpush2.msra.mxu0 0.0
      %990 = vmatprep.subr.mxu0 0.0
      %991 = vmatpush2.msra.mxu0 0.0
      %992 = vmatprep.subr.mxu0 0.0
      %993 = vmatpush2.msra.mxu0 0.0
      %994 = vmatprep.subr.mxu0 0.0
      %995 = vmatpush2.msra.mxu0 0.0
      %996 = vmatprep.subr.mxu0 0.0
      %997 = vmatpush2.msra.mxu0 0.0
      %998 = vmatprep.subr.mxu0 0.0
      %999 = vmatpush2.msra.mxu0 0.0
      %1000 = vmatprep.subr.mxu0 0.0
      %1001 = vmatpush2.msra.mxu0 0.0
      %1002 = vmatprep.subr.mxu0 0.0
      %1003 = vmatpush2.msra.mxu0 0.0
      %1004 = vmatprep.subr.mxu0 0.0
      %1005 = vmatpush2.msra.mxu0 0.0
      %1006 = vmatprep.subr.mxu0 0.0
      %1007 = vmatpush2.msra.mxu0 0.0
      %1008 = vmatprep.subr.mxu0 0.0
      %1009 = vmatpush2.msra.mxu0 0.0
      %1010 = vmatprep.subr.mxu0 0.0
      %1011 = vmatpush2.msra.mxu0 0.0
      %1012 = vmatprep.subr.mxu0 0.0
      %1013 = vmatpush2.msra.mxu0 0.0
      %1014 = vmatprep.mubr.f32.mxu0 0.0
      %1015 = vmatmul.mubr.f32.gmra.mxu0 %v946
      %v1016 = vpop.f32.mrf.mxu0
      %v1017 = vadd.f32 0.0, %v1016
      %v1018 = vpop.f32.mrf.mxu0
      %v1019 = vadd.f32 0.0, %v1018
      %1020 = vmatprep.mubr.f32.mxu0 0.0
      %1021 = vmatmul.mubr.f32.gmra.mxu0 %v948
      %v1022 = vpop.f32.mrf.mxu0
      %v1023 = vadd.f32 0.0, %v1022
      %v1024 = vpop.f32.mrf.mxu0
      %v1025 = vadd.f32 0.0, %v1024
      %1026 = vdwg.mxu0
      %v1027 = vadd.f32 %v938, %v1017
      %v1028 = vadd.f32 %v939, %v1019
      %v1029 = vadd.f32 %v940, %v1023
      %v1030 = vadd.f32 %v941, %v1025
      %1031 = vrot.lane.b32.xlu0 %v311, 96
      %v1032 = vpop.permute.xlu0 %1031
      %1033 = vrot.lane.b32.xlu0 %v313, 96
      %v1034 = vpop.permute.xlu0 %1033
      %v1035 = vsel %vm844, %v1032, 0
      %v1037 = vsel %vm844, %v1034, 0
      %1039 = vmatprep.subr.mxu0 0.0
      %1040 = vmatpush1.msra.mxu0 0.0
      %1041 = vmatprep.subr.mxu0 0.0
      %1042 = vmatpush1.msra.mxu0 0.0
      %1043 = vmatprep.subr.mxu0 0.0
      %1044 = vmatpush1.msra.mxu0 0.0
      %1045 = vmatprep.subr.mxu0 0.0
      %1046 = vmatpush1.msra.mxu0 0.0
      %1047 = vmatprep.subr.mxu0 0.0
      %1048 = vmatpush1.msra.mxu0 0.0
      %1049 = vmatprep.subr.mxu0 0.0
      %1050 = vmatpush1.msra.mxu0 0.0
      %1051 = vmatprep.subr.mxu0 0.0
      %1052 = vmatpush1.msra.mxu0 0.0
      %1053 = vmatprep.subr.mxu0 0.0
      %1054 = vmatpush1.msra.mxu0 0.0
      %1055 = vmatprep.subr.mxu0 0.0
      %1056 = vmatpush1.msra.mxu0 0.0
      %1057 = vmatprep.subr.mxu0 0.0
      %1058 = vmatpush1.msra.mxu0 0.0
      %1059 = vmatprep.subr.mxu0 0.0
      %1060 = vmatpush1.msra.mxu0 0.0
      %1061 = vmatprep.subr.mxu0 0.0
      %1062 = vmatpush1.msra.mxu0 0.0
      %1063 = vmatprep.subr.mxu0 0.0
      %1064 = vmatpush1.msra.mxu0 0.0
      %1065 = vmatprep.subr.mxu0 0.0
      %1066 = vmatpush1.msra.mxu0 0.0
      %1067 = vmatprep.subr.mxu0 %v723
      %1068 = vmatpush1.msra.mxu0 %v722
      %1069 = vmatprep.subr.mxu0 %v721
      %1070 = vmatpush1.msra.mxu0 %v720
      %1071 = vmatprep.subr.mxu0 0.0
      %1072 = vmatpush2.msra.mxu0 0.0
      %1073 = vmatprep.subr.mxu0 0.0
      %1074 = vmatpush2.msra.mxu0 0.0
      %1075 = vmatprep.subr.mxu0 0.0
      %1076 = vmatpush2.msra.mxu0 0.0
      %1077 = vmatprep.subr.mxu0 0.0
      %1078 = vmatpush2.msra.mxu0 0.0
      %1079 = vmatprep.subr.mxu0 0.0
      %1080 = vmatpush2.msra.mxu0 0.0
      %1081 = vmatprep.subr.mxu0 0.0
      %1082 = vmatpush2.msra.mxu0 0.0
      %1083 = vmatprep.subr.mxu0 0.0
      %1084 = vmatpush2.msra.mxu0 0.0
      %1085 = vmatprep.subr.mxu0 0.0
      %1086 = vmatpush2.msra.mxu0 0.0
      %1087 = vmatprep.subr.mxu0 0.0
      %1088 = vmatpush2.msra.mxu0 0.0
      %1089 = vmatprep.subr.mxu0 0.0
      %1090 = vmatpush2.msra.mxu0 0.0
      %1091 = vmatprep.subr.mxu0 0.0
      %1092 = vmatpush2.msra.mxu0 0.0
      %1093 = vmatprep.subr.mxu0 0.0
      %1094 = vmatpush2.msra.mxu0 0.0
      %1095 = vmatprep.subr.mxu0 0.0
      %1096 = vmatpush2.msra.mxu0 0.0
      %1097 = vmatprep.subr.mxu0 0.0
      %1098 = vmatpush2.msra.mxu0 0.0
      %1099 = vmatprep.subr.mxu0 0.0
      %1100 = vmatpush2.msra.mxu0 0.0
      %1101 = vmatprep.subr.mxu0 0.0
      %1102 = vmatpush2.msra.mxu0 0.0
      %1103 = vmatprep.mubr.f32.mxu0 0.0
      %1104 = vmatmul.mubr.f32.gmra.mxu0 %v1035
      %v1105 = vpop.f32.mrf.mxu0
      %v1106 = vadd.f32 0.0, %v1105
      %v1107 = vpop.f32.mrf.mxu0
      %v1108 = vadd.f32 0.0, %v1107
      %1109 = vmatprep.mubr.f32.mxu0 0.0
      %1110 = vmatmul.mubr.f32.gmra.mxu0 %v1037
      %v1111 = vpop.f32.mrf.mxu0
      %v1112 = vadd.f32 0.0, %v1111
      %v1113 = vpop.f32.mrf.mxu0
      %v1114 = vadd.f32 0.0, %v1113
      %1115 = vdwg.mxu0
      %v1116 = vadd.f32 %v1027, %v1106
      %v1117 = vadd.f32 %v1028, %v1108
      %v1118 = vadd.f32 %v1029, %v1112
      %v1119 = vadd.f32 %v1030, %v1114
      %1120 = vrot.lane.b32.xlu0 %v311, 80
      %v1121 = vpop.permute.xlu0 %1120
      %1122 = vrot.lane.b32.xlu0 %v313, 80
      %v1123 = vpop.permute.xlu0 %1122
      %v1124 = vsel %vm844, %v1121, 0
      %v1126 = vsel %vm844, %v1123, 0
      %1128 = vmatprep.subr.mxu0 0.0
      %1129 = vmatpush1.msra.mxu0 0.0
      %1130 = vmatprep.subr.mxu0 0.0
      %1131 = vmatpush1.msra.mxu0 0.0
      %1132 = vmatprep.subr.mxu0 0.0
      %1133 = vmatpush1.msra.mxu0 0.0
      %1134 = vmatprep.subr.mxu0 0.0
      %1135 = vmatpush1.msra.mxu0 0.0
      %1136 = vmatprep.subr.mxu0 0.0
      %1137 = vmatpush1.msra.mxu0 0.0
      %1138 = vmatprep.subr.mxu0 0.0
      %1139 = vmatpush1.msra.mxu0 0.0
      %1140 = vmatprep.subr.mxu0 0.0
      %1141 = vmatpush1.msra.mxu0 0.0
      %1142 = vmatprep.subr.mxu0 0.0
      %1143 = vmatpush1.msra.mxu0 0.0
      %1144 = vmatprep.subr.mxu0 0.0
      %1145 = vmatpush1.msra.mxu0 0.0
      %1146 = vmatprep.subr.mxu0 0.0
      %1147 = vmatpush1.msra.mxu0 0.0
      %1148 = vmatprep.subr.mxu0 0.0
      %1149 = vmatpush1.msra.mxu0 0.0
      %1150 = vmatprep.subr.mxu0 0.0
      %1151 = vmatpush1.msra.mxu0 0.0
      %1152 = vmatprep.subr.mxu0 0.0
      %1153 = vmatpush1.msra.mxu0 0.0
      %1154 = vmatprep.subr.mxu0 0.0
      %1155 = vmatpush1.msra.mxu0 0.0
      %1156 = vmatprep.subr.mxu0 %v747
      %1157 = vmatpush1.msra.mxu0 %v746
      %1158 = vmatprep.subr.mxu0 %v745
      %1159 = vmatpush1.msra.mxu0 %v744
      %1160 = vmatprep.subr.mxu0 0.0
      %1161 = vmatpush2.msra.mxu0 0.0
      %1162 = vmatprep.subr.mxu0 0.0
      %1163 = vmatpush2.msra.mxu0 0.0
      %1164 = vmatprep.subr.mxu0 0.0
      %1165 = vmatpush2.msra.mxu0 0.0
      %1166 = vmatprep.subr.mxu0 0.0
      %1167 = vmatpush2.msra.mxu0 0.0
      %1168 = vmatprep.subr.mxu0 0.0
      %1169 = vmatpush2.msra.mxu0 0.0
      %1170 = vmatprep.subr.mxu0 0.0
      %1171 = vmatpush2.msra.mxu0 0.0
      %1172 = vmatprep.subr.mxu0 0.0
      %1173 = vmatpush2.msra.mxu0 0.0
      %1174 = vmatprep.subr.mxu0 0.0
      %1175 = vmatpush2.msra.mxu0 0.0
      %1176 = vmatprep.subr.mxu0 0.0
      %1177 = vmatpush2.msra.mxu0 0.0
      %1178 = vmatprep.subr.mxu0 0.0
      %1179 = vmatpush2.msra.mxu0 0.0
      %1180 = vmatprep.subr.mxu0 0.0
      %1181 = vmatpush2.msra.mxu0 0.0
      %1182 = vmatprep.subr.mxu0 0.0
      %1183 = vmatpush2.msra.mxu0 0.0
      %1184 = vmatprep.subr.mxu0 0.0
      %1185 = vmatpush2.msra.mxu0 0.0
      %1186 = vmatprep.subr.mxu0 0.0
      %1187 = vmatpush2.msra.mxu0 0.0
      %1188 = vmatprep.subr.mxu0 0.0
      %1189 = vmatpush2.msra.mxu0 0.0
      %1190 = vmatprep.subr.mxu0 0.0
      %1191 = vmatpush2.msra.mxu0 0.0
      %1192 = vmatprep.mubr.f32.mxu0 0.0
      %1193 = vmatmul.mubr.f32.gmra.mxu0 %v1124
      %v1194 = vpop.f32.mrf.mxu0
      %v1195 = vadd.f32 0.0, %v1194
      %v1196 = vpop.f32.mrf.mxu0
      %v1197 = vadd.f32 0.0, %v1196
      %1198 = vmatprep.mubr.f32.mxu0 0.0
      %1199 = vmatmul.mubr.f32.gmra.mxu0 %v1126
      %v1200 = vpop.f32.mrf.mxu0
      %v1201 = vadd.f32 0.0, %v1200
      %v1202 = vpop.f32.mrf.mxu0
      %v1203 = vadd.f32 0.0, %v1202
      %1204 = vdwg.mxu0
      %v1205 = vadd.f32 %v1116, %v1195
      %v1206 = vadd.f32 %v1117, %v1197
      %v1207 = vadd.f32 %v1118, %v1201
      %v1208 = vadd.f32 %v1119, %v1203
      %1209 = vrot.lane.b32.xlu0 %v311, 64
      %v1210 = vpop.permute.xlu0 %1209
      %1211 = vrot.lane.b32.xlu0 %v313, 64
      %v1212 = vpop.permute.xlu0 %1211
      %v1213 = vsel %vm844, %v1210, 0
      %v1215 = vsel %vm844, %v1212, 0
      %1217 = vmatprep.subr.mxu0 0.0
      %1218 = vmatpush1.msra.mxu0 0.0
      %1219 = vmatprep.subr.mxu0 0.0
      %1220 = vmatpush1.msra.mxu0 0.0
      %1221 = vmatprep.subr.mxu0 0.0
      %1222 = vmatpush1.msra.mxu0 0.0
      %1223 = vmatprep.subr.mxu0 0.0
      %1224 = vmatpush1.msra.mxu0 0.0
      %1225 = vmatprep.subr.mxu0 0.0
      %1226 = vmatpush1.msra.mxu0 0.0
      %1227 = vmatprep.subr.mxu0 0.0
      %1228 = vmatpush1.msra.mxu0 0.0
      %1229 = vmatprep.subr.mxu0 0.0
      %1230 = vmatpush1.msra.mxu0 0.0
      %1231 = vmatprep.subr.mxu0 0.0
      %1232 = vmatpush1.msra.mxu0 0.0
      %1233 = vmatprep.subr.mxu0 0.0
      %1234 = vmatpush1.msra.mxu0 0.0
      %1235 = vmatprep.subr.mxu0 0.0
      %1236 = vmatpush1.msra.mxu0 0.0
      %1237 = vmatprep.subr.mxu0 0.0
      %1238 = vmatpush1.msra.mxu0 0.0
      %1239 = vmatprep.subr.mxu0 0.0
      %1240 = vmatpush1.msra.mxu0 0.0
      %1241 = vmatprep.subr.mxu0 0.0
      %1242 = vmatpush1.msra.mxu0 0.0
      %1243 = vmatprep.subr.mxu0 0.0
      %1244 = vmatpush1.msra.mxu0 0.0
      %1245 = vmatprep.subr.mxu0 %v651
      %1246 = vmatpush1.msra.mxu0 %v650
      %1247 = vmatprep.subr.mxu0 %v649
      %1248 = vmatpush1.msra.mxu0 %v648
      %1249 = vmatprep.subr.mxu0 0.0
      %1250 = vmatpush2.msra.mxu0 0.0
      %1251 = vmatprep.subr.mxu0 0.0
      %1252 = vmatpush2.msra.mxu0 0.0
      %1253 = vmatprep.subr.mxu0 0.0
      %1254 = vmatpush2.msra.mxu0 0.0
      %1255 = vmatprep.subr.mxu0 0.0
      %1256 = vmatpush2.msra.mxu0 0.0
      %1257 = vmatprep.subr.mxu0 0.0
      %1258 = vmatpush2.msra.mxu0 0.0
      %1259 = vmatprep.subr.mxu0 0.0
      %1260 = vmatpush2.msra.mxu0 0.0
      %1261 = vmatprep.subr.mxu0 0.0
      %1262 = vmatpush2.msra.mxu0 0.0
      %1263 = vmatprep.subr.mxu0 0.0
      %1264 = vmatpush2.msra.mxu0 0.0
      %1265 = vmatprep.subr.mxu0 0.0
      %1266 = vmatpush2.msra.mxu0 0.0
      %1267 = vmatprep.subr.mxu0 0.0
      %1268 = vmatpush2.msra.mxu0 0.0
      %1269 = vmatprep.subr.mxu0 0.0
      %1270 = vmatpush2.msra.mxu0 0.0
      %1271 = vmatprep.subr.mxu0 0.0
      %1272 = vmatpush2.msra.mxu0 0.0
      %1273 = vmatprep.subr.mxu0 0.0
      %1274 = vmatpush2.msra.mxu0 0.0
      %1275 = vmatprep.subr.mxu0 0.0
      %1276 = vmatpush2.msra.mxu0 0.0
      %1277 = vmatprep.subr.mxu0 0.0
      %1278 = vmatpush2.msra.mxu0 0.0
      %1279 = vmatprep.subr.mxu0 0.0
      %1280 = vmatpush2.msra.mxu0 0.0
      %1281 = vmatprep.mubr.f32.mxu0 0.0
      %1282 = vmatmul.mubr.f32.gmra.mxu0 %v1213
      %v1283 = vpop.f32.mrf.mxu0
      %v1284 = vadd.f32 0.0, %v1283
      %v1285 = vpop.f32.mrf.mxu0
      %v1286 = vadd.f32 0.0, %v1285
      %1287 = vmatprep.mubr.f32.mxu0 0.0
      %1288 = vmatmul.mubr.f32.gmra.mxu0 %v1215
      %v1289 = vpop.f32.mrf.mxu0
      %v1290 = vadd.f32 0.0, %v1289
      %v1291 = vpop.f32.mrf.mxu0
      %v1292 = vadd.f32 0.0, %v1291
      %1293 = vdwg.mxu0
      %v1294 = vadd.f32 %v1205, %v1284
      %v1295 = vadd.f32 %v1206, %v1286
      %v1296 = vadd.f32 %v1207, %v1290
      %v1297 = vadd.f32 %v1208, %v1292
      %1298 = vrot.lane.b32.xlu0 %v311, 48
      %v1299 = vpop.permute.xlu0 %1298
      %1300 = vrot.lane.b32.xlu0 %v313, 48
      %v1301 = vpop.permute.xlu0 %1300
      %v1302 = vsel %vm844, %v1299, 0
      %v1304 = vsel %vm844, %v1301, 0
      %1306 = vmatprep.subr.mxu0 0.0
      %1307 = vmatpush1.msra.mxu0 0.0
      %1308 = vmatprep.subr.mxu0 0.0
      %1309 = vmatpush1.msra.mxu0 0.0
      %1310 = vmatprep.subr.mxu0 0.0
      %1311 = vmatpush1.msra.mxu0 0.0
      %1312 = vmatprep.subr.mxu0 0.0
      %1313 = vmatpush1.msra.mxu0 0.0
      %1314 = vmatprep.subr.mxu0 0.0
      %1315 = vmatpush1.msra.mxu0 0.0
      %1316 = vmatprep.subr.mxu0 0.0
      %1317 = vmatpush1.msra.mxu0 0.0
      %1318 = vmatprep.subr.mxu0 0.0
      %1319 = vmatpush1.msra.mxu0 0.0
      %1320 = vmatprep.subr.mxu0 0.0
      %1321 = vmatpush1.msra.mxu0 0.0
      %1322 = vmatprep.subr.mxu0 0.0
      %1323 = vmatpush1.msra.mxu0 0.0
      %1324 = vmatprep.subr.mxu0 0.0
      %1325 = vmatpush1.msra.mxu0 0.0
      %1326 = vmatprep.subr.mxu0 0.0
      %1327 = vmatpush1.msra.mxu0 0.0
      %1328 = vmatprep.subr.mxu0 0.0
      %1329 = vmatpush1.msra.mxu0 0.0
      %1330 = vmatprep.subr.mxu0 0.0
      %1331 = vmatpush1.msra.mxu0 0.0
      %1332 = vmatprep.subr.mxu0 0.0
      %1333 = vmatpush1.msra.mxu0 0.0
      %1334 = vmatprep.subr.mxu0 %v771
      %1335 = vmatpush1.msra.mxu0 %v770
      %1336 = vmatprep.subr.mxu0 %v769
      %1337 = vmatpush1.msra.mxu0 %v768
      %1338 = vmatprep.subr.mxu0 0.0
      %1339 = vmatpush2.msra.mxu0 0.0
      %1340 = vmatprep.subr.mxu0 0.0
      %1341 = vmatpush2.msra.mxu0 0.0
      %1342 = vmatprep.subr.mxu0 0.0
      %1343 = vmatpush2.msra.mxu0 0.0
      %1344 = vmatprep.subr.mxu0 0.0
      %1345 = vmatpush2.msra.mxu0 0.0
      %1346 = vmatprep.subr.mxu0 0.0
      %1347 = vmatpush2.msra.mxu0 0.0
      %1348 = vmatprep.subr.mxu0 0.0
      %1349 = vmatpush2.msra.mxu0 0.0
      %1350 = vmatprep.subr.mxu0 0.0
      %1351 = vmatpush2.msra.mxu0 0.0
      %1352 = vmatprep.subr.mxu0 0.0
      %1353 = vmatpush2.msra.mxu0 0.0
      %1354 = vmatprep.subr.mxu0 0.0
      %1355 = vmatpush2.msra.mxu0 0.0
      %1356 = vmatprep.subr.mxu0 0.0
      %1357 = vmatpush2.msra.mxu0 0.0
      %1358 = vmatprep.subr.mxu0 0.0
      %1359 = vmatpush2.msra.mxu0 0.0
      %1360 = vmatprep.subr.mxu0 0.0
      %1361 = vmatpush2.msra.mxu0 0.0
      %1362 = vmatprep.subr.mxu0 0.0
      %1363 = vmatpush2.msra.mxu0 0.0
      %1364 = vmatprep.subr.mxu0 0.0
      %1365 = vmatpush2.msra.mxu0 0.0
      %1366 = vmatprep.subr.mxu0 0.0
      %1367 = vmatpush2.msra.mxu0 0.0
      %1368 = vmatprep.subr.mxu0 0.0
      %1369 = vmatpush2.msra.mxu0 0.0
      %1370 = vmatprep.mubr.f32.mxu0 0.0
      %1371 = vmatmul.mubr.f32.gmra.mxu0 %v1302
      %v1372 = vpop.f32.mrf.mxu0
      %v1373 = vadd.f32 0.0, %v1372
      %v1374 = vpop.f32.mrf.mxu0
      %v1375 = vadd.f32 0.0, %v1374
      %1376 = vmatprep.mubr.f32.mxu0 0.0
      %1377 = vmatmul.mubr.f32.gmra.mxu0 %v1304
      %v1378 = vpop.f32.mrf.mxu0
      %v1379 = vadd.f32 0.0, %v1378
      %v1380 = vpop.f32.mrf.mxu0
      %v1381 = vadd.f32 0.0, %v1380
      %1382 = vdwg.mxu0
      %v1383 = vadd.f32 %v1294, %v1373
      %v1384 = vadd.f32 %v1295, %v1375
      %v1385 = vadd.f32 %v1296, %v1379
      %v1386 = vadd.f32 %v1297, %v1381
      %1387 = vrot.lane.b32.xlu0 %v311, 32
      %v1388 = vpop.permute.xlu0 %1387
      %1389 = vrot.lane.b32.xlu0 %v313, 32
      %v1390 = vpop.permute.xlu0 %1389
      %v1391 = vsel %vm844, %v1388, 0
      %v1393 = vsel %vm844, %v1390, 0
      %1395 = vmatprep.subr.mxu0 0.0
      %1396 = vmatpush1.msra.mxu0 0.0
      %1397 = vmatprep.subr.mxu0 0.0
      %1398 = vmatpush1.msra.mxu0 0.0
      %1399 = vmatprep.subr.mxu0 0.0
      %1400 = vmatpush1.msra.mxu0 0.0
      %1401 = vmatprep.subr.mxu0 0.0
      %1402 = vmatpush1.msra.mxu0 0.0
      %1403 = vmatprep.subr.mxu0 0.0
      %1404 = vmatpush1.msra.mxu0 0.0
      %1405 = vmatprep.subr.mxu0 0.0
      %1406 = vmatpush1.msra.mxu0 0.0
      %1407 = vmatprep.subr.mxu0 0.0
      %1408 = vmatpush1.msra.mxu0 0.0
      %1409 = vmatprep.subr.mxu0 0.0
      %1410 = vmatpush1.msra.mxu0 0.0
      %1411 = vmatprep.subr.mxu0 0.0
      %1412 = vmatpush1.msra.mxu0 0.0
      %1413 = vmatprep.subr.mxu0 0.0
      %1414 = vmatpush1.msra.mxu0 0.0
      %1415 = vmatprep.subr.mxu0 0.0
      %1416 = vmatpush1.msra.mxu0 0.0
      %1417 = vmatprep.subr.mxu0 0.0
      %1418 = vmatpush1.msra.mxu0 0.0
      %1419 = vmatprep.subr.mxu0 0.0
      %1420 = vmatpush1.msra.mxu0 0.0
      %1421 = vmatprep.subr.mxu0 0.0
      %1422 = vmatpush1.msra.mxu0 0.0
      %1423 = vmatprep.subr.mxu0 %v795
      %1424 = vmatpush1.msra.mxu0 %v794
      %1425 = vmatprep.subr.mxu0 %v793
      %1426 = vmatpush1.msra.mxu0 %v792
      %1427 = vmatprep.subr.mxu0 0.0
      %1428 = vmatpush2.msra.mxu0 0.0
      %1429 = vmatprep.subr.mxu0 0.0
      %1430 = vmatpush2.msra.mxu0 0.0
      %1431 = vmatprep.subr.mxu0 0.0
      %1432 = vmatpush2.msra.mxu0 0.0
      %1433 = vmatprep.subr.mxu0 0.0
      %1434 = vmatpush2.msra.mxu0 0.0
      %1435 = vmatprep.subr.mxu0 0.0
      %1436 = vmatpush2.msra.mxu0 0.0
      %1437 = vmatprep.subr.mxu0 0.0
      %1438 = vmatpush2.msra.mxu0 0.0
      %1439 = vmatprep.subr.mxu0 0.0
      %1440 = vmatpush2.msra.mxu0 0.0
      %1441 = vmatprep.subr.mxu0 0.0
      %1442 = vmatpush2.msra.mxu0 0.0
      %1443 = vmatprep.subr.mxu0 0.0
      %1444 = vmatpush2.msra.mxu0 0.0
      %1445 = vmatprep.subr.mxu0 0.0
      %1446 = vmatpush2.msra.mxu0 0.0
      %1447 = vmatprep.subr.mxu0 0.0
      %1448 = vmatpush2.msra.mxu0 0.0
      %1449 = vmatprep.subr.mxu0 0.0
      %1450 = vmatpush2.msra.mxu0 0.0
      %1451 = vmatprep.subr.mxu0 0.0
      %1452 = vmatpush2.msra.mxu0 0.0
      %1453 = vmatprep.subr.mxu0 0.0
      %1454 = vmatpush2.msra.mxu0 0.0
      %1455 = vmatprep.subr.mxu0 0.0
      %1456 = vmatpush2.msra.mxu0 0.0
      %1457 = vmatprep.subr.mxu0 0.0
      %1458 = vmatpush2.msra.mxu0 0.0
      %1459 = vmatprep.mubr.f32.mxu0 0.0
      %1460 = vmatmul.mubr.f32.gmra.mxu0 %v1391
      %v1461 = vpop.f32.mrf.mxu0
      %v1462 = vadd.f32 0.0, %v1461
      %v1463 = vpop.f32.mrf.mxu0
      %v1464 = vadd.f32 0.0, %v1463
      %1465 = vmatprep.mubr.f32.mxu0 0.0
      %1466 = vmatmul.mubr.f32.gmra.mxu0 %v1393
      %v1467 = vpop.f32.mrf.mxu0
      %v1468 = vadd.f32 0.0, %v1467
      %v1469 = vpop.f32.mrf.mxu0
      %v1470 = vadd.f32 0.0, %v1469
      %1471 = vdwg.mxu0
      %v1472 = vadd.f32 %v1383, %v1462
      %v1473 = vadd.f32 %v1384, %v1464
      %v1474 = vadd.f32 %v1385, %v1468
      %v1475 = vadd.f32 %v1386, %v1470
      %1476 = vrot.lane.b32.xlu0 %v311, 16
      %v1477 = vpop.permute.xlu0 %1476
      %1478 = vrot.lane.b32.xlu0 %v313, 16
      %v1479 = vpop.permute.xlu0 %1478
      %v1480 = vsel %vm844, %v1477, 0
      %v1482 = vsel %vm844, %v1479, 0
      %1484 = vmatprep.subr.mxu0 0.0
      %1485 = vmatpush1.msra.mxu0 0.0
      %1486 = vmatprep.subr.mxu0 0.0
      %1487 = vmatpush1.msra.mxu0 0.0
      %1488 = vmatprep.subr.mxu0 0.0
      %1489 = vmatpush1.msra.mxu0 0.0
      %1490 = vmatprep.subr.mxu0 0.0
      %1491 = vmatpush1.msra.mxu0 0.0
      %1492 = vmatprep.subr.mxu0 0.0
      %1493 = vmatpush1.msra.mxu0 0.0
      %1494 = vmatprep.subr.mxu0 0.0
      %1495 = vmatpush1.msra.mxu0 0.0
      %1496 = vmatprep.subr.mxu0 0.0
      %1497 = vmatpush1.msra.mxu0 0.0
      %1498 = vmatprep.subr.mxu0 0.0
      %1499 = vmatpush1.msra.mxu0 0.0
      %1500 = vmatprep.subr.mxu0 0.0
      %1501 = vmatpush1.msra.mxu0 0.0
      %1502 = vmatprep.subr.mxu0 0.0
      %1503 = vmatpush1.msra.mxu0 0.0
      %1504 = vmatprep.subr.mxu0 0.0
      %1505 = vmatpush1.msra.mxu0 0.0
      %1506 = vmatprep.subr.mxu0 0.0
      %1507 = vmatpush1.msra.mxu0 0.0
      %1508 = vmatprep.subr.mxu0 0.0
      %1509 = vmatpush1.msra.mxu0 0.0
      %1510 = vmatprep.subr.mxu0 0.0
      %1511 = vmatpush1.msra.mxu0 0.0
      %1512 = vmatprep.subr.mxu0 %v819
      %1513 = vmatpush1.msra.mxu0 %v818
      %1514 = vmatprep.subr.mxu0 %v817
      %1515 = vmatpush1.msra.mxu0 %v816
      %1516 = vmatprep.subr.mxu0 0.0
      %1517 = vmatpush2.msra.mxu0 0.0
      %1518 = vmatprep.subr.mxu0 0.0
      %1519 = vmatpush2.msra.mxu0 0.0
      %1520 = vmatprep.subr.mxu0 0.0
      %1521 = vmatpush2.msra.mxu0 0.0
      %1522 = vmatprep.subr.mxu0 0.0
      %1523 = vmatpush2.msra.mxu0 0.0
      %1524 = vmatprep.subr.mxu0 0.0
      %1525 = vmatpush2.msra.mxu0 0.0
      %1526 = vmatprep.subr.mxu0 0.0
      %1527 = vmatpush2.msra.mxu0 0.0
      %1528 = vmatprep.subr.mxu0 0.0
      %1529 = vmatpush2.msra.mxu0 0.0
      %1530 = vmatprep.subr.mxu0 0.0
      %1531 = vmatpush2.msra.mxu0 0.0
      %1532 = vmatprep.subr.mxu0 0.0
      %1533 = vmatpush2.msra.mxu0 0.0
      %1534 = vmatprep.subr.mxu0 0.0
      %1535 = vmatpush2.msra.mxu0 0.0
      %1536 = vmatprep.subr.mxu0 0.0
      %1537 = vmatpush2.msra.mxu0 0.0
      %1538 = vmatprep.subr.mxu0 0.0
      %1539 = vmatpush2.msra.mxu0 0.0
      %1540 = vmatprep.subr.mxu0 0.0
      %1541 = vmatpush2.msra.mxu0 0.0
      %1542 = vmatprep.subr.mxu0 0.0
      %1543 = vmatpush2.msra.mxu0 0.0
      %1544 = vmatprep.subr.mxu0 0.0
      %1545 = vmatpush2.msra.mxu0 0.0
      %1546 = vmatprep.subr.mxu0 0.0
      %1547 = vmatpush2.msra.mxu0 0.0
      %1548 = vmatprep.mubr.f32.mxu0 0.0
      %1549 = vmatmul.mubr.f32.gmra.mxu0 %v1480
      %v1550 = vpop.f32.mrf.mxu0
      %v1551 = vadd.f32 0.0, %v1550
      %v1552 = vpop.f32.mrf.mxu0
      %v1553 = vadd.f32 0.0, %v1552
      %1554 = vmatprep.mubr.f32.mxu0 0.0
      %1555 = vmatmul.mubr.f32.gmra.mxu0 %v1482
      %v1556 = vpop.f32.mrf.mxu0
      %v1557 = vadd.f32 0.0, %v1556
      %v1558 = vpop.f32.mrf.mxu0
      %v1559 = vadd.f32 0.0, %v1558
      %1560 = vdwg.mxu0
      %v1561 = vadd.f32 %v1472, %v1551
      %v1562 = vadd.f32 %v1473, %v1553
      %v1563 = vadd.f32 %v1474, %v1557
      %v1564 = vadd.f32 %v1475, %v1559
      %v1566 = vsel %vm844, %v312, 0
      %v1569 = vsel %vm844, %v314, 0
      %1571 = vmatprep.subr.mxu0 0.0
      %1572 = vmatpush1.msra.mxu0 0.0
      %1573 = vmatprep.subr.mxu0 0.0
      %1574 = vmatpush1.msra.mxu0 0.0
      %1575 = vmatprep.subr.mxu0 0.0
      %1576 = vmatpush1.msra.mxu0 0.0
      %1577 = vmatprep.subr.mxu0 0.0
      %1578 = vmatpush1.msra.mxu0 0.0
      %1579 = vmatprep.subr.mxu0 0.0
      %1580 = vmatpush1.msra.mxu0 0.0
      %1581 = vmatprep.subr.mxu0 0.0
      %1582 = vmatpush1.msra.mxu0 0.0
      %1583 = vmatprep.subr.mxu0 0.0
      %1584 = vmatpush1.msra.mxu0 0.0
      %1585 = vmatprep.subr.mxu0 0.0
      %1586 = vmatpush1.msra.mxu0 0.0
      %1587 = vmatprep.subr.mxu0 0.0
      %1588 = vmatpush1.msra.mxu0 0.0
      %1589 = vmatprep.subr.mxu0 0.0
      %1590 = vmatpush1.msra.mxu0 0.0
      %1591 = vmatprep.subr.mxu0 0.0
      %1592 = vmatpush1.msra.mxu0 0.0
      %1593 = vmatprep.subr.mxu0 0.0
      %1594 = vmatpush1.msra.mxu0 0.0
      %1595 = vmatprep.subr.mxu0 0.0
      %1596 = vmatpush1.msra.mxu0 0.0
      %1597 = vmatprep.subr.mxu0 0.0
      %1598 = vmatpush1.msra.mxu0 0.0
      %1599 = vmatprep.subr.mxu0 %v843
      %1600 = vmatpush1.msra.mxu0 %v842
      %1601 = vmatprep.subr.mxu0 %v841
      %1602 = vmatpush1.msra.mxu0 %v840
      %1603 = vmatprep.subr.mxu0 0.0
      %1604 = vmatpush2.msra.mxu0 0.0
      %1605 = vmatprep.subr.mxu0 0.0
      %1606 = vmatpush2.msra.mxu0 0.0
      %1607 = vmatprep.subr.mxu0 0.0
      %1608 = vmatpush2.msra.mxu0 0.0
      %1609 = vmatprep.subr.mxu0 0.0
      %1610 = vmatpush2.msra.mxu0 0.0
      %1611 = vmatprep.subr.mxu0 0.0
      %1612 = vmatpush2.msra.mxu0 0.0
      %1613 = vmatprep.subr.mxu0 0.0
      %1614 = vmatpush2.msra.mxu0 0.0
      %1615 = vmatprep.subr.mxu0 0.0
      %1616 = vmatpush2.msra.mxu0 0.0
      %1617 = vmatprep.subr.mxu0 0.0
      %1618 = vmatpush2.msra.mxu0 0.0
      %1619 = vmatprep.subr.mxu0 0.0
      %1620 = vmatpush2.msra.mxu0 0.0
      %1621 = vmatprep.subr.mxu0 0.0
      %1622 = vmatpush2.msra.mxu0 0.0
      %1623 = vmatprep.subr.mxu0 0.0
      %1624 = vmatpush2.msra.mxu0 0.0
      %1625 = vmatprep.subr.mxu0 0.0
      %1626 = vmatpush2.msra.mxu0 0.0
      %1627 = vmatprep.subr.mxu0 0.0
      %1628 = vmatpush2.msra.mxu0 0.0
      %1629 = vmatprep.subr.mxu0 0.0
      %1630 = vmatpush2.msra.mxu0 0.0
      %1631 = vmatprep.subr.mxu0 0.0
      %1632 = vmatpush2.msra.mxu0 0.0
      %1633 = vmatprep.subr.mxu0 0.0
      %1634 = vmatpush2.msra.mxu0 0.0
      %1635 = vmatprep.mubr.f32.mxu0 0.0
      %1636 = vmatmul.mubr.f32.gmra.mxu0 %v1566
      %v1637 = vpop.f32.mrf.mxu0
      %v1638 = vadd.f32 0.0, %v1637
      %v1639 = vpop.f32.mrf.mxu0
      %v1640 = vadd.f32 0.0, %v1639
      %1641 = vmatprep.mubr.f32.mxu0 0.0
      %1642 = vmatmul.mubr.f32.gmra.mxu0 %v1569
      %v1643 = vpop.f32.mrf.mxu0
      %v1644 = vadd.f32 0.0, %v1643
      %v1645 = vpop.f32.mrf.mxu0
      %v1646 = vadd.f32 0.0, %v1645
      %1647 = vdwg.mxu0
      %v1648 = vadd.f32 %v1561, %v1638
      %v1649 = vadd.f32 %v1562, %v1640
      %v1650 = vadd.f32 %v1563, %v1644
      %v1651 = vadd.f32 %v1564, %v1646
      %1652 = vrot.lane.b32.xlu0 %v1648, 17
      %v1653 = vpop.permute.xlu0 %1652
      %1654 = vrot.lane.b32.xlu0 %v1650, 17
      %v1655 = vpop.permute.xlu0 %1654
      %1656 = vrot.lane.b32.xlu0 %v1649, 17
      %v1657 = vpop.permute.xlu0 %1656
      %1658 = vrot.lane.b32.xlu0 %v1651, 17
      %v1659 = vpop.permute.xlu0 %1658
      %v1660 = vsel %vm338, %v1653, %v1657
      %v1661 = vsel %vm338, %v1655, %v1659
      %v1662 = vsel %vm338, %v1657, %v1653
      %v1663 = vsel %vm338, %v1659, %v1655
      %v1664 = vmul.f32 %v1662, %v667
      %v1665 = vmul.f32 %v1660, %v671
      %v1666 = vmul.f32 %v1663, %v667
      %v1667 = vmul.f32 %v1661, %v671
      %1668 = vrot.lane.b32.xlu0 %v1648, 16
      %v1669 = vpop.permute.xlu0 %1668
      %1670 = vrot.lane.b32.xlu0 %v1650, 16
      %v1671 = vpop.permute.xlu0 %1670
      %1672 = vrot.lane.b32.xlu0 %v1649, 16
      %v1673 = vpop.permute.xlu0 %1672
      %1674 = vrot.lane.b32.xlu0 %v1651, 16
      %v1675 = vpop.permute.xlu0 %1674
      %v1676 = vsel %vm347, %v1669, %v1673
      %v1677 = vsel %vm347, %v1671, %v1675
      %v1678 = vsel %vm347, %v1673, %v1669
      %v1679 = vsel %vm347, %v1675, %v1671
      %v1680 = vmul.f32 %v1678, %v691
      %v1681 = vmul.f32 %v1676, %v695
      %v1682 = vmul.f32 %v1679, %v691
      %v1683 = vmul.f32 %v1677, %v695
      %1684 = vrot.lane.b32.xlu0 %v1648, 15
      %v1685 = vpop.permute.xlu0 %1684
      %1686 = vrot.lane.b32.xlu0 %v1650, 15
      %v1687 = vpop.permute.xlu0 %1686
      %1688 = vrot.lane.b32.xlu0 %v1649, 15
      %v1689 = vpop.permute.xlu0 %1688
      %1690 = vrot.lane.b32.xlu0 %v1651, 15
      %v1691 = vpop.permute.xlu0 %1690
      %v1692 = vsel %vm362, %v1685, %v1689
      %v1693 = vsel %vm362, %v1687, %v1691
      %v1694 = vsel %vm362, %v1689, %v1685
      %v1695 = vsel %vm362, %v1691, %v1687
      %v1696 = vmul.f32 %v1694, %v715
      %v1697 = vmul.f32 %v1692, %v719
      %v1698 = vmul.f32 %v1695, %v715
      %v1699 = vmul.f32 %v1693, %v719
      %1700 = vrot.lane.b32.xlu0 %v1648, 1
      %v1701 = vpop.permute.xlu0 %1700
      %1702 = vrot.lane.b32.xlu0 %v1650, 1
      %v1703 = vpop.permute.xlu0 %1702
      %1704 = vrot.lane.b32.xlu0 %v1649, 1
      %v1705 = vpop.permute.xlu0 %1704
      %1706 = vrot.lane.b32.xlu0 %v1651, 1
      %v1707 = vpop.permute.xlu0 %1706
      %v1708 = vsel %vm375, %v1701, %v1705
      %v1709 = vsel %vm375, %v1703, %v1707
      %v1710 = vsel %vm375, %v1705, %v1701
      %v1711 = vsel %vm375, %v1707, %v1703
      %v1712 = vmul.f32 %v1710, %v739
      %v1713 = vmul.f32 %v1708, %v743
      %v1714 = vmul.f32 %v1711, %v739
      %v1715 = vmul.f32 %v1709, %v743
      %1716 = vrot.lane.b32.xlu0 %v1648, 127
      %v1717 = vpop.permute.xlu0 %1716
      %1718 = vrot.lane.b32.xlu0 %v1650, 127
      %v1719 = vpop.permute.xlu0 %1718
      %1720 = vrot.lane.b32.xlu0 %v1649, 127
      %v1721 = vpop.permute.xlu0 %1720
      %1722 = vrot.lane.b32.xlu0 %v1651, 127
      %v1723 = vpop.permute.xlu0 %1722
      %v1724 = vsel %vm388, %v1717, %v1721
      %v1725 = vsel %vm388, %v1719, %v1723
      %v1726 = vsel %vm388, %v1721, %v1717
      %v1727 = vsel %vm388, %v1723, %v1719
      %v1728 = vmul.f32 %v1724, %v763
      %v1729 = vmul.f32 %v1726, %v767
      %v1730 = vmul.f32 %v1725, %v763
      %v1731 = vmul.f32 %v1727, %v767
      %1732 = vrot.lane.b32.xlu0 %v1648, 113
      %v1733 = vpop.permute.xlu0 %1732
      %1734 = vrot.lane.b32.xlu0 %v1650, 113
      %v1735 = vpop.permute.xlu0 %1734
      %1736 = vrot.lane.b32.xlu0 %v1649, 113
      %v1737 = vpop.permute.xlu0 %1736
      %1738 = vrot.lane.b32.xlu0 %v1651, 113
      %v1739 = vpop.permute.xlu0 %1738
      %v1740 = vsel %vm401, %v1733, %v1737
      %v1741 = vsel %vm401, %v1735, %v1739
      %v1742 = vsel %vm401, %v1737, %v1733
      %v1743 = vsel %vm401, %v1739, %v1735
      %v1744 = vmul.f32 %v1740, %v787
      %v1745 = vmul.f32 %v1742, %v791
      %v1746 = vmul.f32 %v1741, %v787
      %v1747 = vmul.f32 %v1743, %v791
      %1748 = vrot.lane.b32.xlu0 %v1648, 112
      %v1749 = vpop.permute.xlu0 %1748
      %1750 = vrot.lane.b32.xlu0 %v1650, 112
      %v1751 = vpop.permute.xlu0 %1750
      %1752 = vrot.lane.b32.xlu0 %v1649, 112
      %v1753 = vpop.permute.xlu0 %1752
      %1754 = vrot.lane.b32.xlu0 %v1651, 112
      %v1755 = vpop.permute.xlu0 %1754
      %v1756 = vsel %vm414, %v1749, %v1753
      %v1757 = vsel %vm414, %v1751, %v1755
      %v1758 = vsel %vm414, %v1753, %v1749
      %v1759 = vsel %vm414, %v1755, %v1751
      %v1760 = vmul.f32 %v1756, %v811
      %v1761 = vmul.f32 %v1758, %v815
      %v1762 = vmul.f32 %v1757, %v811
      %v1763 = vmul.f32 %v1759, %v815
      %1764 = vrot.lane.b32.xlu0 %v1648, 111
      %v1765 = vpop.permute.xlu0 %1764
      %1766 = vrot.lane.b32.xlu0 %v1650, 111
      %v1767 = vpop.permute.xlu0 %1766
      %1768 = vrot.lane.b32.xlu0 %v1649, 111
      %v1769 = vpop.permute.xlu0 %1768
      %1770 = vrot.lane.b32.xlu0 %v1651, 111
      %v1771 = vpop.permute.xlu0 %1770
      %v1772 = vsel %vm427, %v1765, %v1769
      %v1773 = vsel %vm427, %v1767, %v1771
      %v1774 = vsel %vm427, %v1769, %v1765
      %v1775 = vsel %vm427, %v1771, %v1767
      %v1776 = vmul.f32 %v1772, %v835
      %v1777 = vmul.f32 %v1774, %v839
      %v1778 = vmul.f32 %v1773, %v835
      %v1779 = vmul.f32 %v1775, %v839
      %1781 = vset.pattern.permute.xlu0 0
      %1782 = vperm.xlu0 %1781, %v317
      %v1783 = vpop.permute.xlu0 %1782
      %1786 = vset.pattern.permute.xlu0 0
      %1787 = vperm.xlu0 %1786, %v318
      %v1788 = vpop.permute.xlu0 %1787
      %v1790 = vmul.f32 %v1783, %v1664
      %v1791 = vmul.f32 %v1783, %v1665
      %v1792 = vmul.f32 %v1788, %v1666
      %v1793 = vmul.f32 %v1788, %v1667
      %v1794 = vadd.f32 %v1790, 0.0
      %v1795 = vadd.f32 %v1791, 0.0
      %v1796 = vadd.f32 %v1792, 0.0
      %v1797 = vadd.f32 %v1793, 0.0
      %1798 = vset.pattern.permute.xlu0 1
      %1799 = vperm.xlu0 %1798, %v317
      %v1800 = vpop.permute.xlu0 %1799
      %1802 = vset.pattern.permute.xlu0 1
      %1803 = vperm.xlu0 %1802, %v318
      %v1804 = vpop.permute.xlu0 %1803
      %v1806 = vmul.f32 %v1800, %v1680
      %v1807 = vmul.f32 %v1800, %v1681
      %v1808 = vmul.f32 %v1804, %v1682
      %v1809 = vmul.f32 %v1804, %v1683
      %v1810 = vadd.f32 %v1794, %v1806
      %v1811 = vadd.f32 %v1795, %v1807
      %v1812 = vadd.f32 %v1796, %v1808
      %v1813 = vadd.f32 %v1797, %v1809
      %1814 = vset.pattern.permute.xlu0 2
      %1815 = vperm.xlu0 %1814, %v317
      %v1816 = vpop.permute.xlu0 %1815
      %1818 = vset.pattern.permute.xlu0 2
      %1819 = vperm.xlu0 %1818, %v318
      %v1820 = vpop.permute.xlu0 %1819
      %v1822 = vmul.f32 %v1816, %v1696
      %v1823 = vmul.f32 %v1816, %v1697
      %v1824 = vmul.f32 %v1820, %v1698
      %v1825 = vmul.f32 %v1820, %v1699
      %v1826 = vadd.f32 %v1810, %v1822
      %v1827 = vadd.f32 %v1811, %v1823
      %v1828 = vadd.f32 %v1812, %v1824
      %v1829 = vadd.f32 %v1813, %v1825
      %1830 = vset.pattern.permute.xlu0 3
      %1831 = vperm.xlu0 %1830, %v317
      %v1832 = vpop.permute.xlu0 %1831
      %1834 = vset.pattern.permute.xlu0 3
      %1835 = vperm.xlu0 %1834, %v318
      %v1836 = vpop.permute.xlu0 %1835
      %v1838 = vmul.f32 %v1832, %v1712
      %v1839 = vmul.f32 %v1832, %v1713
      %v1840 = vmul.f32 %v1836, %v1714
      %v1841 = vmul.f32 %v1836, %v1715
      %v1842 = vadd.f32 %v1826, %v1838
      %v1843 = vadd.f32 %v1827, %v1839
      %v1844 = vadd.f32 %v1828, %v1840
      %v1845 = vadd.f32 %v1829, %v1841
      %1846 = vset.pattern.permute.xlu0 4
      %1847 = vperm.xlu0 %1846, %v317
      %v1848 = vpop.permute.xlu0 %1847
      %1850 = vset.pattern.permute.xlu0 4
      %1851 = vperm.xlu0 %1850, %v318
      %v1852 = vpop.permute.xlu0 %1851
      %v1854 = vmul.f32 %v1848, %v1648
      %v1855 = vmul.f32 %v1848, %v1649
      %v1856 = vmul.f32 %v1852, %v1650
      %v1857 = vmul.f32 %v1852, %v1651
      %v1858 = vadd.f32 %v1842, %v1854
      %v1859 = vadd.f32 %v1843, %v1855
      %v1860 = vadd.f32 %v1844, %v1856
      %v1861 = vadd.f32 %v1845, %v1857
      %1862 = vset.pattern.permute.xlu0 5
      %1863 = vperm.xlu0 %1862, %v317
      %v1864 = vpop.permute.xlu0 %1863
      %1866 = vset.pattern.permute.xlu0 5
      %1867 = vperm.xlu0 %1866, %v318
      %v1868 = vpop.permute.xlu0 %1867
      %v1870 = vmul.f32 %v1864, %v1728
      %v1871 = vmul.f32 %v1864, %v1729
      %v1872 = vmul.f32 %v1868, %v1730
      %v1873 = vmul.f32 %v1868, %v1731
      %v1874 = vadd.f32 %v1858, %v1870
      %v1875 = vadd.f32 %v1859, %v1871
      %v1876 = vadd.f32 %v1860, %v1872
      %v1877 = vadd.f32 %v1861, %v1873
      %1878 = vset.pattern.permute.xlu0 6
      %1879 = vperm.xlu0 %1878, %v317
      %v1880 = vpop.permute.xlu0 %1879
      %1882 = vset.pattern.permute.xlu0 6
      %1883 = vperm.xlu0 %1882, %v318
      %v1884 = vpop.permute.xlu0 %1883
      %v1886 = vmul.f32 %v1880, %v1744
      %v1887 = vmul.f32 %v1880, %v1745
      %v1888 = vmul.f32 %v1884, %v1746
      %v1889 = vmul.f32 %v1884, %v1747
      %v1890 = vadd.f32 %v1874, %v1886
      %v1891 = vadd.f32 %v1875, %v1887
      %v1892 = vadd.f32 %v1876, %v1888
      %v1893 = vadd.f32 %v1877, %v1889
      %1894 = vset.pattern.permute.xlu0 7
      %1895 = vperm.xlu0 %1894, %v317
      %v1896 = vpop.permute.xlu0 %1895
      %1898 = vset.pattern.permute.xlu0 7
      %1899 = vperm.xlu0 %1898, %v318
      %v1900 = vpop.permute.xlu0 %1899
      %v1902 = vmul.f32 %v1896, %v1760
      %v1903 = vmul.f32 %v1896, %v1761
      %v1904 = vmul.f32 %v1900, %v1762
      %v1905 = vmul.f32 %v1900, %v1763
      %v1906 = vadd.f32 %v1890, %v1902
      %v1907 = vadd.f32 %v1891, %v1903
      %v1908 = vadd.f32 %v1892, %v1904
      %v1909 = vadd.f32 %v1893, %v1905
      %1910 = vset.pattern.permute.xlu0 8
      %1911 = vperm.xlu0 %1910, %v317
      %v1912 = vpop.permute.xlu0 %1911
      %1914 = vset.pattern.permute.xlu0 8
      %1915 = vperm.xlu0 %1914, %v318
      %v1916 = vpop.permute.xlu0 %1915
      %v1918 = vmul.f32 %v1912, %v1776
      %v1919 = vmul.f32 %v1912, %v1777
      %v1920 = vmul.f32 %v1916, %v1778
      %v1921 = vmul.f32 %v1916, %v1779
      %v1922 = vadd.f32 %v1906, %v1918
      %v1923 = vadd.f32 %v1907, %v1919
      %v1924 = vadd.f32 %v1908, %v1920
      %v1925 = vadd.f32 %v1909, %v1921
      %v1926 = vadd.f32 %v1922, %v1924
      %v1927 = vrot.slane %v1926, 4
      %v1928 = vadd.f32 %v1926, %v1927
      %v1929 = vrot.slane %v1928, 2
      %v1930 = vadd.f32 %v1928, %v1929
      %v1931 = vrot.slane %v1930, 1
      %v1932 = vadd.f32 %v1930, %v1931
      %v1933 = vadd.f32 %v1923, %v1925
      %v1934 = vrot.slane %v1933, 4
      %v1935 = vadd.f32 %v1933, %v1934
      %v1936 = vrot.slane %v1935, 2
      %v1937 = vadd.f32 %v1935, %v1936
      %v1938 = vrot.slane %v1937, 1
      %v1939 = vadd.f32 %v1937, %v1938
      %1941 = vset.pattern.permute.xlu0 0
      %1942 = vperm.xlu0 %1941, %v319
      %v1943 = vpop.permute.xlu0 %1942
      %v1945 = vlaneseq
      %v1946 = vshrl.u32 %v1945, 7
      %v1947 = vsub.s32 0, %v1946
      %v1948 = vrot.slane %v1943, %v1947
      %v1949 = vadd.f32 %v1932, %v1948
      %v1950 = vadd.f32 %v1939, %v1948
      %v1951 = vmul.f32 %v1949, 4.0
      %v1952 = vmul.f32 %v1950, 4.0
      %v1953 = vxor.u32 %v1951, 2147483648
      %v1954 = vxor.u32 %v1952, 2147483648
      %v1955 = vmul.f32 %v1953, 1.442695
      %v1956 = vpow.pop %v1955
      %v1957 = vmul.f32 %v1954, 1.442695
      %v1958 = vpow.pop %v1957
      %v1959 = vadd.f32 %v1956, 1.0
      %v1960 = vadd.f32 %v1958, 1.0
      %v1961 = vrcp.pop %v1959
      %v1962 = vmul.f32 1.0, %v1961
      %v1963 = vrcp.pop %v1960
      %v1964 = vmul.f32 1.0, %v1963
      %v1967 = vcombine.low %v1962, %v1964
      %v1969 = vunpack.c.l.s4 1966171168
      %v1970 = vunpack.c.0.s8 %v1969
      %v1971 = vlaneseq
      %v1972 = vshrl.u32 %v1971, 7
      %v1973 = vsub.s32 %v1970, %v1972
      %v1974 = vrot.slane %v1967, %v1973
      %v1976 = vunpack.c.l.s4 1966171168
      %v1977 = vunpack.c.0.s8 %v1976
      %v1978 = vlaneseq
      %v1979 = vshrl.u32 %v1978, 7
      %v1980 = vsub.s32 %v1977, %v1979
      %v1981 = vrot.slane %v1974, %v1980
      %v1983 = vlaneseq
      %vm1984 = vcmp.ge.s32.totalorder %v1983, 0
      %vm1985 = vcmp.lt.s32.totalorder %v1983, 256
      %vm1986 = vmand %vm1984, %vm1985
      %1987 = vst.msk [vmem:[%s302] sm:$0x3] %vm1986, %v1981
      %p1988 = scmp.lt.s32.totalorder %s21, 1
      %s1989 = scalar_select %p1988, %s21, 1
      %s1990 = smul.addr %s1989, 2
      %s1991 = scalar_lea.vmem %s8, %s1990
      // Predicated region
      $region53: #{weight_map_ft_forward.1} parent=51 // pred_check
        %p1992 = pneg %p212
      $region54: #{weight_map_ft_forward.1} parent=51 // pred_check_branch
        %1994 = sbr.rel (%p1992) target = $region56
      $region55: #{weight_map_ft_forward.1} parent=51 // pred_region
        _
      $region56: #{weight_map_ft_forward.1} parent=51 // pred_fallthru
        _
    $region52: #{weight_map_ft_forward.1} parent=5 // pred_fallthru
      _
    %p1995 = scmp.le.s32.totalorder 2, %s16
    // Predicated region
    $region57: #{weight_map_ft_forward.1} parent=5 // pred_check
      %p1996 = pneg %p1995
    $region58: #{weight_map_ft_forward.1} parent=5 // pred_check_branch
      %1998 = sbr.rel (%p1996) target = $region60
    $region59: #{weight_map_ft_forward.1} parent=5 // pred_region
      %s1999 = ssub.s32 %s16, 2
      // Predicated region
      $region61: #{weight_map_ft_forward.1} parent=59 // pred_check
        %p2000 = pneg %p218
      $region62: #{weight_map_ft_forward.1} parent=59 // pred_check_branch
        %2002 = sbr.rel (%p2000) target = $region64
      $region63: #{weight_map_ft_forward.1} parent=59 // pred_region
        %p2003 = scmp.lt.s32.totalorder %s22, 1
        %s2004 = scalar_select %p2003, %s22, 1
        %s2005 = smul.addr %s2004, 2
        %s2006 = scalar_lea.vmem %s8, %s2005
      $region64: #{weight_map_ft_forward.1} parent=59 // pred_fallthru
        _
    $region60: #{weight_map_ft_forward.1} parent=5 // pred_fallthru
      _
  $region6: #{weight_map_ft_forward.1} parent=0 // loop_footer
    %s20 = sadd.s32 1, %s16
  $region7: #{weight_map_ft_forward.1} parent=0 // loop_footer_branch
    %15 = sbr.rel target = $region3
  $region8: #{weight_map_ft_forward.1} parent=0 // loop_exit
    _

</llo_original>
